<compile_context>
chip_gen: v7x
topology: tpu7x:2x2x1
jax: 0.10.0
libtpu: 0.0.40
codegen_flags: <defaults>
</compile_context>

<pallas_src>
import functools

import numpy as np
import jax
import jax.numpy as jnp
from jax import lax
from jax.experimental import pallas as pl
from jax.experimental.pallas import tpu as pltpu

BN_EPS = 1e-5


# --------------------------------------------------------------------------
# Fused kernel (one batch element per grid step)
# --------------------------------------------------------------------------

def _df_kernel(*refs, H, W, has_reduction):
    HW = H * W
    x_ref, m_ref = refs[0], refs[1]
    i = 2
    if has_reduction:
        wr_ref, br_ref = refs[2], refs[3]
        i = 4
    (w1_ref, b1_ref, w2_ref, b2_ref, w3_ref, b3_ref,
     wo1_ref, bo1_ref, wo2_ref, bo2_ref, wc_ref, bc_ref) = refs[i:i + 12]
    out_ref = refs[i + 12]

    masks = m_ref[...]                                   # (9, 2*HW) f32 {0,1}

    def mm(w_ref_, x, b_ref_):
        # Weight-stationary matmul + bias + ReLU; bf16 MXU inputs, f32 accum.
        y = jnp.dot(w_ref_[...], x.astype(jnp.bfloat16),
                    preferred_element_type=jnp.float32)
        return jnp.maximum(y + b_ref_[...], 0.0)

    def conv3x3(z, w_ref_, b_ref_):
        # z: (Cin, L) with L in {HW, 2*HW}; one im2col matmul.
        L = z.shape[-1]
        taps = []
        for t in range(9):
            dy, dx = t // 3 - 1, t % 3 - 1
            s = dy * W + dx                              # flat pixel offset
            if s == 0:
                taps.append(z)                           # center tap: mask == 1
            else:
                shifted = pltpu.roll(z, (-s) % L, axis=1)   # tap[p] = z[p + s]
                taps.append(shifted * masks[t:t + 1, :L])   # zero halo / seam
        col = jnp.concatenate(taps, axis=0)              # (9*Cin, L)
        return mm(w_ref_, col, b_ref_)

    z = x_ref[0]                                         # (Cin, 2*HW): [x | y]
    if has_reduction:
        z = mm(wr_ref, z, br_ref)                        # 1x1 conv + BN + ReLU

    # densecat layers: cat1 rows [0:d], cat2 rows [d:2d] (fused along Cout).
    z1 = conv3x3(z, w1_ref, b1_ref)                      # (2d, 2*HW)
    z2 = conv3x3(z1, w2_ref, b2_ref)                     # block-diag weights
    z3 = conv3x3(z1 + z2, w3_ref, b3_ref)
    s = z1 + z2 + z3

    u = s[:, :HW] + s[:, HW:]                            # temporal sum
    v = jnp.abs(s[:, :HW] - s[:, HW:])                   # temporal |diff|
    x_add = mm(wo1_ref, u, bo1_ref)                      # cat1 conv_out (+BN+ReLU)
    x_diff = mm(wo2_ref, v, bo2_ref)                     # cat2 conv_out (+BN+ReLU)

    y = conv3x3(x_diff, wc_ref, bc_ref)                  # final 3x3 + BN + ReLU
    out_ref[0] = (y + x_add).astype(out_ref.dtype)


# --------------------------------------------------------------------------
# Wrapper
# --------------------------------------------------------------------------

def _tap_masks(H, W, n_seg):
    """(9, n_seg*H*W) {0,1} masks: valid iff the tap stays inside the image."""
    p = np.arange(H * W)
    h, w = p // W, p % W
    rows = []
    for t in range(9):
        dy, dx = t // 3 - 1, t % 3 - 1
        ok = (h + dy >= 0) & (h + dy < H) & (w + dx >= 0) & (w + dx < W)
        rows.append(np.tile(ok.astype(np.float32), n_seg))
    return jnp.asarray(np.stack(rows))


def df_module_forward(x1_nchw, x2_nchw, params):
    N, C, H, W = x1_nchw.shape
    HW = H * W
    has_red = params['reduction'] is not None
    c1, c2 = params['cat1'], params['cat2']
    d = c1['w1'].shape[0]                      # densecat channel count
    dim_out = params['wc'].shape[0]
    bf16, f32 = jnp.bfloat16, jnp.float32

    # Stack the temporal pair once in HBM along the lane (pixel) axis.
    x_pair = jnp.concatenate(
        [x1_nchw.reshape(N, C, HW), x2_nchw.reshape(N, C, HW)],
        axis=-1).astype(f32)                   # (N, C, 2*HW)
    masks = _tap_masks(H, W, 2)                # (9, 2*HW)

    args = [x_pair, masks]
    in_specs = [pl.BlockSpec((1, C, 2 * HW), lambda n: (n, 0, 0)),
                pl.BlockSpec(masks.shape, lambda n: (0, 0))]

    def add_param(a):
        args.append(a)
        in_specs.append(pl.BlockSpec(a.shape, lambda n: (0, 0)))

    def pad_cin(w, cin_t):                     # (Cout, 9, Cin) -> (Cout, 9, cin_t)
        cin = w.shape[-1]
        if cin_t == cin:
            return w
        pad = jnp.zeros(w.shape[:-1] + (cin_t - cin,), w.dtype)
        return jnp.concatenate([w, pad], axis=-1)

    if has_red:
        wr, br = params['reduction']           # (d, C), (d,)
        d_pad = -(-d // 8) * 8                 # pad channels to a sublane tile
        if d_pad != d:
            wr = jnp.concatenate([wr, jnp.zeros((d_pad - d, C), wr.dtype)], axis=0)
            br = jnp.concatenate([br, jnp.zeros((d_pad - d,), br.dtype)])
        add_param(wr.astype(bf16))
        add_param(br.reshape(-1, 1).astype(f32))
        cin1 = d_pad
    else:
        cin1 = C

    # Layer 1: cat1/cat2 fused along Cout (shared input).
    w1s = jnp.concatenate([pad_cin(c1['w1'], cin1), pad_cin(c2['w1'], cin1)],
                          axis=0).reshape(2 * d, 9 * cin1)
    b1s = jnp.concatenate([c1['b1'], c2['b1']]).reshape(2 * d, 1)
    add_param(w1s.astype(bf16))
    add_param(b1s.astype(f32))

    # Layers 2/3: block-diagonal weights (cat1 rows only see cat1 channels).
    def block_diag(wa, wb):                    # 2 x (d, 9, d) -> (2d, 9*2d)
        z = jnp.zeros_like(wa)
        top = jnp.concatenate([wa, z], axis=-1)
        bot = jnp.concatenate([z, wb], axis=-1)
        return jnp.concatenate([top, bot], axis=0).reshape(2 * d, 9 * 2 * d)

    for li in (2, 3):
        wi = block_diag(c1[f'w{li}'], c2[f'w{li}'])
        bi = jnp.concatenate([c1[f'b{li}'], c2[f'b{li}']]).reshape(2 * d, 1)
        add_param(wi.astype(bf16))
        add_param(bi.astype(f32))

    # conv_out (1x1 + folded BN): zero-pad over the other branch's channels.
    wo1 = jnp.concatenate([c1['wo'], jnp.zeros_like(c1['wo'])], axis=1)
    wo2 = jnp.concatenate([jnp.zeros_like(c2['wo']), c2['wo']], axis=1)
    add_param(wo1.astype(bf16))
    add_param(c1['bo'].reshape(-1, 1).astype(f32))
    add_param(wo2.astype(bf16))
    add_param(c2['bo'].reshape(-1, 1).astype(f32))

    # Final 3x3 conv + folded BN.
    add_param(params['wc'].reshape(dim_out, 9 * dim_out).astype(bf16))
    add_param(params['bc'].reshape(-1, 1).astype(f32))

    out_flat = pl.pallas_call(
        functools.partial(_df_kernel, H=H, W=W, has_reduction=has_red),
        out_shape=jax.ShapeDtypeStruct((N, dim_out, HW), f32),
        grid=(N,),
        in_specs=in_specs,
        out_specs=pl.BlockSpec((1, dim_out, HW), lambda n: (n, 0, 0)),
        compiler_params=pltpu.CompilerParams(
            dimension_semantics=("parallel",)),      # megacore-shard batch (v7x)
    )(*args)
    return out_flat.reshape(N, dim_out, H, W)        # NCHW for free


# --------------------------------------------------------------------------
# Parameters (deterministic; BN folded eval-mode; weights bf16-representable)
# --------------------------------------------------------------------------

def _fold_bn(w, b, gamma, beta, mean, var, eps=BN_EPS):
    scale = gamma / jnp.sqrt(var + eps)              # per output channel (axis 0)
    w_f = w * scale.reshape((-1,) + (1,) * (w.ndim - 1))
    b_f = (b - mean) * scale + beta
    return w_f, b_f


def init_params(key, dim_in, dim_out, reduction=True):
    kit = iter(jax.random.split(key, 64))

    def randn(shape, scale):
        return scale * jax.random.normal(next(kit), shape, jnp.float32)

    def bn_stats(c):
        gamma = 1.0 + 0.1 * jax.random.normal(next(kit), (c,), jnp.float32)
        beta = 0.1 * jax.random.normal(next(kit), (c,), jnp.float32)
        mean = 0.05 * jax.random.normal(next(kit), (c,), jnp.float32)
        var = 0.5 + jnp.abs(jax.random.normal(next(kit), (c,), jnp.float32))
        return gamma, beta, mean, var

    def bf16_grid(w):    # make weights exactly bf16-representable
        return w.astype(jnp.bfloat16).astype(jnp.float32)

    params = {}
    d = dim_in
    if reduction:
        d = dim_in // 2
        wr, br = randn((d, dim_in), 0.2), randn((d,), 0.05)
        wr, br = _fold_bn(wr, br, *bn_stats(d))
        params['reduction'] = (bf16_grid(wr), br)
    else:
        params['reduction'] = None

    def densecat_params():
        p = {}
        for li in (1, 2, 3):
            p[f'w{li}'] = bf16_grid(randn((d, 9, d), 0.2))   # (Cout, tap, Cin)
            p[f'b{li}'] = randn((d,), 0.05)
        wo, bo = randn((dim_out, d), 0.2), randn((dim_out,), 0.05)
        wo, bo = _fold_bn(wo, bo, *bn_stats(dim_out))
        p['wo'], p['bo'] = bf16_grid(wo), bo
        return p

    params['cat1'] = densecat_params()     # densecat_cat_add
    params['cat2'] = densecat_params()     # densecat_cat_diff

    wc, bc = randn((dim_out, 9, dim_out), 0.2), randn((dim_out,), 0.05)
    wc, bc = _fold_bn(wc, bc, *bn_stats(dim_out))
    params['wc'], params['bc'] = bf16_grid(wc), bc
    return params


# --------------------------------------------------------------------------
# Pure-JAX reference (f32 throughout) for correctness check
# --------------------------------------------------------------------------

def _ref_forward(x1_nchw, x2_nchw, params):
    x1 = jnp.transpose(x1_nchw, (0, 2, 3, 1)).astype(jnp.float32)
    x2 = jnp.transpose(x2_nchw, (0, 2, 3, 1)).astype(jnp.float32)

    def conv1x1(x, w, b):                  # w: (Cout, Cin)
        y = jnp.einsum('nhwc,oc->nhwo', x, w) + b.reshape(1, 1, 1, -1)
        return jnp.maximum(y, 0.0)

    def conv3x3(x, w, b):                  # w: (Cout, 9, Cin), tap = dy*3+dx
        cout, _, cin = w.shape
        w_hwio = jnp.transpose(w.reshape(cout, 3, 3, cin), (1, 2, 3, 0))
        y = lax.conv_general_dilated(
            x, w_hwio, (1, 1), 'SAME',
            dimension_numbers=('NHWC', 'HWIO', 'NHWC'))
        return jnp.maximum(y + b.reshape(1, 1, 1, -1), 0.0)

    if params['reduction'] is not None:
        wr, br = params['reduction']
        x1, x2 = conv1x1(x1, wr, br), conv1x1(x2, wr, br)

    def densecat(x, y, p, absdiff):
        x1_ = conv3x3(x, p['w1'], p['b1'])
        x2_ = conv3x3(x1_, p['w2'], p['b2'])
        x3_ = conv3x3(x2_ + x1_, p['w3'], p['b3'])
        y1_ = conv3x3(y, p['w1'], p['b1'])
        y2_ = conv3x3(y1_, p['w2'], p['b2'])
        y3_ = conv3x3(y2_ + y1_, p['w3'], p['b3'])
        sx, sy = x1_ + x2_ + x3_, y1_ + y2_ + y3_
        s = jnp.abs(sx - sy) if absdiff else sx + sy
        return conv1x1(s, p['wo'], p['bo'])

    x_add = densecat(x1, x2, params['cat1'], absdiff=False)
    x_diff = densecat(x1, x2, params['cat2'], absdiff=True)
    y = conv3x3(x_diff, params['wc'], params['bc']) + x_add
    return jnp.transpose(y, (0, 3, 1, 2))


# --------------------------------------------------------------------------
# Demo
# --------------------------------------------------------------------------

if __name__ == "__main__":
    key = jax.random.PRNGKey(0)
    kx1, kx2, kp = jax.random.split(key, 3)

    N, C, H, W = 2, 8, 16, 16               # NCHW like PyTorch
    dim_out = 8

    x1 = jax.random.normal(kx1, (N, C, H, W), jnp.float32)
    x2 = jax.random.normal(kx2, (N, C, H, W), jnp.float32)

    params = init_params(kp, dim_in=C, dim_out=dim_out, reduction=True)

    out = jax.block_until_ready(df_module_forward(x1, x2, params))
    assert out.shape == (N, dim_out, H, W), out.shape
    assert bool(jnp.all(jnp.isfinite(out)))

    ref = jax.block_until_ready(_ref_forward(x1, x2, params))
    max_err = float(jnp.max(jnp.abs(out - ref)))
    # bf16 MXU inputs (f32 accumulation) vs. the f32 reference.
    assert bool(jnp.allclose(out, ref, rtol=2e-2, atol=5e-2)), max_err

    print("KERNEL_OK")
</pallas_src>

<mosaic_0001>
module attributes {stable_mosaic.version = 11 : i64} {
  func.func @_df_kernel(%arg0: i32, %arg1: memref<1x8x512xf32, #tpu.memory_space<vmem>>, %arg2: memref<9x512xf32, #tpu.memory_space<vmem>>, %arg3: memref<8x8xbf16, #tpu.memory_space<vmem>>, %arg4: memref<8x1xf32, #tpu.memory_space<vmem>>, %arg5: memref<8x72xbf16, #tpu.memory_space<vmem>>, %arg6: memref<8x1xf32, #tpu.memory_space<vmem>>, %arg7: memref<8x72xbf16, #tpu.memory_space<vmem>>, %arg8: memref<8x1xf32, #tpu.memory_space<vmem>>, %arg9: memref<8x72xbf16, #tpu.memory_space<vmem>>, %arg10: memref<8x1xf32, #tpu.memory_space<vmem>>, %arg11: memref<8x8xbf16, #tpu.memory_space<vmem>>, %arg12: memref<8x1xf32, #tpu.memory_space<vmem>>, %arg13: memref<8x8xbf16, #tpu.memory_space<vmem>>, %arg14: memref<8x1xf32, #tpu.memory_space<vmem>>, %arg15: memref<8x72xbf16, #tpu.memory_space<vmem>>, %arg16: memref<8x1xf32, #tpu.memory_space<vmem>>, %arg17: memref<1x8x256xf32, #tpu.memory_space<vmem>>) attributes {dimension_semantics = [#tpu.dimension_semantics<parallel>], iteration_bounds = array<i64: 2>, scalar_prefetch = 0 : i64, scratch_operands = 0 : i64, tpu.core_type = #tpu.core_type<tc>, window_params = [{transform_indices = @transform_0, window_bounds = array<i64: 1, 8, 512>}, {pipeline_mode = #tpu.pipeline_mode<synchronous>, transform_indices = @transform_1, window_bounds = array<i64: 9, 512>}, {pipeline_mode = #tpu.pipeline_mode<synchronous>, transform_indices = @transform_2, window_bounds = array<i64: 8, 8>}, {pipeline_mode = #tpu.pipeline_mode<synchronous>, transform_indices = @transform_3, window_bounds = array<i64: 8, 1>}, {pipeline_mode = #tpu.pipeline_mode<synchronous>, transform_indices = @transform_4, window_bounds = array<i64: 8, 72>}, {pipeline_mode = #tpu.pipeline_mode<synchronous>, transform_indices = @transform_5, window_bounds = array<i64: 8, 1>}, {pipeline_mode = #tpu.pipeline_mode<synchronous>, transform_indices = @transform_6, window_bounds = array<i64: 8, 72>}, {pipeline_mode = #tpu.pipeline_mode<synchronous>, transform_indices = @transform_7, window_bounds = array<i64: 8, 1>}, {pipeline_mode = #tpu.pipeline_mode<synchronous>, transform_indices = @transform_8, window_bounds = array<i64: 8, 72>}, {pipeline_mode = #tpu.pipeline_mode<synchronous>, transform_indices = @transform_9, window_bounds = array<i64: 8, 1>}, {pipeline_mode = #tpu.pipeline_mode<synchronous>, transform_indices = @transform_10, window_bounds = array<i64: 8, 8>}, {pipeline_mode = #tpu.pipeline_mode<synchronous>, transform_indices = @transform_11, window_bounds = array<i64: 8, 1>}, {pipeline_mode = #tpu.pipeline_mode<synchronous>, transform_indices = @transform_12, window_bounds = array<i64: 8, 8>}, {pipeline_mode = #tpu.pipeline_mode<synchronous>, transform_indices = @transform_13, window_bounds = array<i64: 8, 1>}, {pipeline_mode = #tpu.pipeline_mode<synchronous>, transform_indices = @transform_14, window_bounds = array<i64: 8, 72>}, {pipeline_mode = #tpu.pipeline_mode<synchronous>, transform_indices = @transform_15, window_bounds = array<i64: 8, 1>}, {transform_indices = @transform_16, window_bounds = array<i64: 1, 8, 256>}]} {
    %c0 = arith.constant 0 : index
    %c0_0 = arith.constant 0 : index
    %0 = vector.load %arg2[%c0, %c0_0] : memref<9x512xf32, #tpu.memory_space<vmem>>, vector<9x512xf32>
    %c0_1 = arith.constant 0 : index
    %c0_2 = arith.constant 0 : index
    %c0_3 = arith.constant 0 : index
    %1 = vector.load %arg1[%c0_1, %c0_2, %c0_3] : memref<1x8x512xf32, #tpu.memory_space<vmem>>, vector<1x8x512xf32>
    %2 = vector.shape_cast %1 : vector<1x8x512xf32> to vector<8x512xf32>
    %c0_4 = arith.constant 0 : index
    %c0_5 = arith.constant 0 : index
    %3 = vector.load %arg3[%c0_4, %c0_5] : memref<8x8xbf16, #tpu.memory_space<vmem>>, vector<8x8xbf16>
    %4 = arith.truncf %2 : vector<8x512xf32> to vector<8x512xbf16>
    %cst = arith.constant dense<0.000000e+00> : vector<8x512xf32>
    %5 = tpu.matmul %3, %4, %cst {dimension_numbers = #tpu.dot_dimension_numbers<[1], [0], [0], [1], [0, 0, 1, 1], [], []>} : vector<8x8xbf16>, vector<8x512xbf16>, vector<8x512xf32> -> vector<8x512xf32>
    %c0_6 = arith.constant 0 : index
    %c0_7 = arith.constant 0 : index
    %6 = vector.load %arg4[%c0_6, %c0_7] : memref<8x1xf32, #tpu.memory_space<vmem>>, vector<8x1xf32>
    %7 = vector.broadcast %6 : vector<8x1xf32> to vector<8x512xf32>
    %8 = arith.addf %5, %7 : vector<8x512xf32>
    %cst_8 = arith.constant 0.000000e+00 : f32
    %9 = vector.broadcast %cst_8 : f32 to vector<8x512xf32>
    %10 = arith.maximumf %8, %9 : vector<8x512xf32>
    %c17_i32 = arith.constant 17 : i32
    %11 = tpu.dynamic_rotate %10 by %c17_i32 dim 1 : vector<8x512xf32>, i32 -> vector<8x512xf32>
    %12 = vector.extract_strided_slice %0 {offsets = [0, 0], sizes = [1, 512], strides = [1, 1]} : vector<9x512xf32> to vector<1x512xf32>
    %13 = vector.broadcast %12 : vector<1x512xf32> to vector<8x512xf32>
    %14 = arith.mulf %11, %13 : vector<8x512xf32>
    %c16_i32 = arith.constant 16 : i32
    %15 = tpu.dynamic_rotate %10 by %c16_i32 dim 1 : vector<8x512xf32>, i32 -> vector<8x512xf32>
    %16 = vector.extract_strided_slice %0 {offsets = [1, 0], sizes = [1, 512], strides = [1, 1]} : vector<9x512xf32> to vector<1x512xf32>
    %17 = vector.broadcast %16 : vector<1x512xf32> to vector<8x512xf32>
    %18 = arith.mulf %15, %17 : vector<8x512xf32>
    %c15_i32 = arith.constant 15 : i32
    %19 = tpu.dynamic_rotate %10 by %c15_i32 dim 1 : vector<8x512xf32>, i32 -> vector<8x512xf32>
    %20 = vector.extract_strided_slice %0 {offsets = [2, 0], sizes = [1, 512], strides = [1, 1]} : vector<9x512xf32> to vector<1x512xf32>
    %21 = vector.broadcast %20 : vector<1x512xf32> to vector<8x512xf32>
    %22 = arith.mulf %19, %21 : vector<8x512xf32>
    %c1_i32 = arith.constant 1 : i32
    %23 = tpu.dynamic_rotate %10 by %c1_i32 dim 1 : vector<8x512xf32>, i32 -> vector<8x512xf32>
    %24 = vector.extract_strided_slice %0 {offsets = [3, 0], sizes = [1, 512], strides = [1, 1]} : vector<9x512xf32> to vector<1x512xf32>
    %25 = vector.broadcast %24 : vector<1x512xf32> to vector<8x512xf32>
    %26 = arith.mulf %23, %25 : vector<8x512xf32>
    %c511_i32 = arith.constant 511 : i32
    %27 = tpu.dynamic_rotate %10 by %c511_i32 dim 1 : vector<8x512xf32>, i32 -> vector<8x512xf32>
    %28 = vector.extract_strided_slice %0 {offsets = [5, 0], sizes = [1, 512], strides = [1, 1]} : vector<9x512xf32> to vector<1x512xf32>
    %29 = vector.broadcast %28 : vector<1x512xf32> to vector<8x512xf32>
    %30 = arith.mulf %27, %29 : vector<8x512xf32>
    %c497_i32 = arith.constant 497 : i32
    %31 = tpu.dynamic_rotate %10 by %c497_i32 dim 1 : vector<8x512xf32>, i32 -> vector<8x512xf32>
    %32 = vector.extract_strided_slice %0 {offsets = [6, 0], sizes = [1, 512], strides = [1, 1]} : vector<9x512xf32> to vector<1x512xf32>
    %33 = vector.broadcast %32 : vector<1x512xf32> to vector<8x512xf32>
    %34 = arith.mulf %31, %33 : vector<8x512xf32>
    %c496_i32 = arith.constant 496 : i32
    %35 = tpu.dynamic_rotate %10 by %c496_i32 dim 1 : vector<8x512xf32>, i32 -> vector<8x512xf32>
    %36 = vector.extract_strided_slice %0 {offsets = [7, 0], sizes = [1, 512], strides = [1, 1]} : vector<9x512xf32> to vector<1x512xf32>
    %37 = vector.broadcast %36 : vector<1x512xf32> to vector<8x512xf32>
    %38 = arith.mulf %35, %37 : vector<8x512xf32>
    %c495_i32 = arith.constant 495 : i32
    %39 = tpu.dynamic_rotate %10 by %c495_i32 dim 1 : vector<8x512xf32>, i32 -> vector<8x512xf32>
    %40 = vector.extract_strided_slice %0 {offsets = [8, 0], sizes = [1, 512], strides = [1, 1]} : vector<9x512xf32> to vector<1x512xf32>
    %41 = vector.broadcast %40 : vector<1x512xf32> to vector<8x512xf32>
    %42 = arith.mulf %39, %41 : vector<8x512xf32>
    %43 = tpu.concatenate %14, %18, %22, %26, %10, %30, %34, %38, %42 in 0 : vector<8x512xf32>, vector<8x512xf32>, vector<8x512xf32>, vector<8x512xf32>, vector<8x512xf32>, vector<8x512xf32>, vector<8x512xf32>, vector<8x512xf32>, vector<8x512xf32> -> vector<72x512xf32>
    %c0_9 = arith.constant 0 : index
    %c0_10 = arith.constant 0 : index
    %44 = vector.load %arg5[%c0_9, %c0_10] : memref<8x72xbf16, #tpu.memory_space<vmem>>, vector<8x72xbf16>
    %45 = arith.truncf %43 : vector<72x512xf32> to vector<72x512xbf16>
    %cst_11 = arith.constant dense<0.000000e+00> : vector<8x512xf32>
    %46 = tpu.matmul %44, %45, %cst_11 {dimension_numbers = #tpu.dot_dimension_numbers<[1], [0], [0], [1], [0, 0, 1, 1], [], []>} : vector<8x72xbf16>, vector<72x512xbf16>, vector<8x512xf32> -> vector<8x512xf32>
    %c0_12 = arith.constant 0 : index
    %c0_13 = arith.constant 0 : index
    %47 = vector.load %arg6[%c0_12, %c0_13] : memref<8x1xf32, #tpu.memory_space<vmem>>, vector<8x1xf32>
    %48 = vector.broadcast %47 : vector<8x1xf32> to vector<8x512xf32>
    %49 = arith.addf %46, %48 : vector<8x512xf32>
    %cst_14 = arith.constant 0.000000e+00 : f32
    %50 = vector.broadcast %cst_14 : f32 to vector<8x512xf32>
    %51 = arith.maximumf %49, %50 : vector<8x512xf32>
    %c17_i32_15 = arith.constant 17 : i32
    %52 = tpu.dynamic_rotate %51 by %c17_i32_15 dim 1 : vector<8x512xf32>, i32 -> vector<8x512xf32>
    %53 = vector.extract_strided_slice %0 {offsets = [0, 0], sizes = [1, 512], strides = [1, 1]} : vector<9x512xf32> to vector<1x512xf32>
    %54 = vector.broadcast %53 : vector<1x512xf32> to vector<8x512xf32>
    %55 = arith.mulf %52, %54 : vector<8x512xf32>
    %c16_i32_16 = arith.constant 16 : i32
    %56 = tpu.dynamic_rotate %51 by %c16_i32_16 dim 1 : vector<8x512xf32>, i32 -> vector<8x512xf32>
    %57 = vector.extract_strided_slice %0 {offsets = [1, 0], sizes = [1, 512], strides = [1, 1]} : vector<9x512xf32> to vector<1x512xf32>
    %58 = vector.broadcast %57 : vector<1x512xf32> to vector<8x512xf32>
    %59 = arith.mulf %56, %58 : vector<8x512xf32>
    %c15_i32_17 = arith.constant 15 : i32
    %60 = tpu.dynamic_rotate %51 by %c15_i32_17 dim 1 : vector<8x512xf32>, i32 -> vector<8x512xf32>
    %61 = vector.extract_strided_slice %0 {offsets = [2, 0], sizes = [1, 512], strides = [1, 1]} : vector<9x512xf32> to vector<1x512xf32>
    %62 = vector.broadcast %61 : vector<1x512xf32> to vector<8x512xf32>
    %63 = arith.mulf %60, %62 : vector<8x512xf32>
    %c1_i32_18 = arith.constant 1 : i32
    %64 = tpu.dynamic_rotate %51 by %c1_i32_18 dim 1 : vector<8x512xf32>, i32 -> vector<8x512xf32>
    %65 = vector.extract_strided_slice %0 {offsets = [3, 0], sizes = [1, 512], strides = [1, 1]} : vector<9x512xf32> to vector<1x512xf32>
    %66 = vector.broadcast %65 : vector<1x512xf32> to vector<8x512xf32>
    %67 = arith.mulf %64, %66 : vector<8x512xf32>
    %c511_i32_19 = arith.constant 511 : i32
    %68 = tpu.dynamic_rotate %51 by %c511_i32_19 dim 1 : vector<8x512xf32>, i32 -> vector<8x512xf32>
    %69 = vector.extract_strided_slice %0 {offsets = [5, 0], sizes = [1, 512], strides = [1, 1]} : vector<9x512xf32> to vector<1x512xf32>
    %70 = vector.broadcast %69 : vector<1x512xf32> to vector<8x512xf32>
    %71 = arith.mulf %68, %70 : vector<8x512xf32>
    %c497_i32_20 = arith.constant 497 : i32
    %72 = tpu.dynamic_rotate %51 by %c497_i32_20 dim 1 : vector<8x512xf32>, i32 -> vector<8x512xf32>
    %73 = vector.extract_strided_slice %0 {offsets = [6, 0], sizes = [1, 512], strides = [1, 1]} : vector<9x512xf32> to vector<1x512xf32>
    %74 = vector.broadcast %73 : vector<1x512xf32> to vector<8x512xf32>
    %75 = arith.mulf %72, %74 : vector<8x512xf32>
    %c496_i32_21 = arith.constant 496 : i32
    %76 = tpu.dynamic_rotate %51 by %c496_i32_21 dim 1 : vector<8x512xf32>, i32 -> vector<8x512xf32>
    %77 = vector.extract_strided_slice %0 {offsets = [7, 0], sizes = [1, 512], strides = [1, 1]} : vector<9x512xf32> to vector<1x512xf32>
    %78 = vector.broadcast %77 : vector<1x512xf32> to vector<8x512xf32>
    %79 = arith.mulf %76, %78 : vector<8x512xf32>
    %c495_i32_22 = arith.constant 495 : i32
    %80 = tpu.dynamic_rotate %51 by %c495_i32_22 dim 1 : vector<8x512xf32>, i32 -> vector<8x512xf32>
    %81 = vector.extract_strided_slice %0 {offsets = [8, 0], sizes = [1, 512], strides = [1, 1]} : vector<9x512xf32> to vector<1x512xf32>
    %82 = vector.broadcast %81 : vector<1x512xf32> to vector<8x512xf32>
    %83 = arith.mulf %80, %82 : vector<8x512xf32>
    %84 = tpu.concatenate %55, %59, %63, %67, %51, %71, %75, %79, %83 in 0 : vector<8x512xf32>, vector<8x512xf32>, vector<8x512xf32>, vector<8x512xf32>, vector<8x512xf32>, vector<8x512xf32>, vector<8x512xf32>, vector<8x512xf32>, vector<8x512xf32> -> vector<72x512xf32>
    %c0_23 = arith.constant 0 : index
    %c0_24 = arith.constant 0 : index
    %85 = vector.load %arg7[%c0_23, %c0_24] : memref<8x72xbf16, #tpu.memory_space<vmem>>, vector<8x72xbf16>
    %86 = arith.truncf %84 : vector<72x512xf32> to vector<72x512xbf16>
    %cst_25 = arith.constant dense<0.000000e+00> : vector<8x512xf32>
    %87 = tpu.matmul %85, %86, %cst_25 {dimension_numbers = #tpu.dot_dimension_numbers<[1], [0], [0], [1], [0, 0, 1, 1], [], []>} : vector<8x72xbf16>, vector<72x512xbf16>, vector<8x512xf32> -> vector<8x512xf32>
    %c0_26 = arith.constant 0 : index
    %c0_27 = arith.constant 0 : index
    %88 = vector.load %arg8[%c0_26, %c0_27] : memref<8x1xf32, #tpu.memory_space<vmem>>, vector<8x1xf32>
    %89 = vector.broadcast %88 : vector<8x1xf32> to vector<8x512xf32>
    %90 = arith.addf %87, %89 : vector<8x512xf32>
    %cst_28 = arith.constant 0.000000e+00 : f32
    %91 = vector.broadcast %cst_28 : f32 to vector<8x512xf32>
    %92 = arith.maximumf %90, %91 : vector<8x512xf32>
    %93 = arith.addf %51, %92 : vector<8x512xf32>
    %c17_i32_29 = arith.constant 17 : i32
    %94 = tpu.dynamic_rotate %93 by %c17_i32_29 dim 1 : vector<8x512xf32>, i32 -> vector<8x512xf32>
    %95 = vector.extract_strided_slice %0 {offsets = [0, 0], sizes = [1, 512], strides = [1, 1]} : vector<9x512xf32> to vector<1x512xf32>
    %96 = vector.broadcast %95 : vector<1x512xf32> to vector<8x512xf32>
    %97 = arith.mulf %94, %96 : vector<8x512xf32>
    %c16_i32_30 = arith.constant 16 : i32
    %98 = tpu.dynamic_rotate %93 by %c16_i32_30 dim 1 : vector<8x512xf32>, i32 -> vector<8x512xf32>
    %99 = vector.extract_strided_slice %0 {offsets = [1, 0], sizes = [1, 512], strides = [1, 1]} : vector<9x512xf32> to vector<1x512xf32>
    %100 = vector.broadcast %99 : vector<1x512xf32> to vector<8x512xf32>
    %101 = arith.mulf %98, %100 : vector<8x512xf32>
    %c15_i32_31 = arith.constant 15 : i32
    %102 = tpu.dynamic_rotate %93 by %c15_i32_31 dim 1 : vector<8x512xf32>, i32 -> vector<8x512xf32>
    %103 = vector.extract_strided_slice %0 {offsets = [2, 0], sizes = [1, 512], strides = [1, 1]} : vector<9x512xf32> to vector<1x512xf32>
    %104 = vector.broadcast %103 : vector<1x512xf32> to vector<8x512xf32>
    %105 = arith.mulf %102, %104 : vector<8x512xf32>
    %c1_i32_32 = arith.constant 1 : i32
    %106 = tpu.dynamic_rotate %93 by %c1_i32_32 dim 1 : vector<8x512xf32>, i32 -> vector<8x512xf32>
    %107 = vector.extract_strided_slice %0 {offsets = [3, 0], sizes = [1, 512], strides = [1, 1]} : vector<9x512xf32> to vector<1x512xf32>
    %108 = vector.broadcast %107 : vector<1x512xf32> to vector<8x512xf32>
    %109 = arith.mulf %106, %108 : vector<8x512xf32>
    %c511_i32_33 = arith.constant 511 : i32
    %110 = tpu.dynamic_rotate %93 by %c511_i32_33 dim 1 : vector<8x512xf32>, i32 -> vector<8x512xf32>
    %111 = vector.extract_strided_slice %0 {offsets = [5, 0], sizes = [1, 512], strides = [1, 1]} : vector<9x512xf32> to vector<1x512xf32>
    %112 = vector.broadcast %111 : vector<1x512xf32> to vector<8x512xf32>
    %113 = arith.mulf %110, %112 : vector<8x512xf32>
    %c497_i32_34 = arith.constant 497 : i32
    %114 = tpu.dynamic_rotate %93 by %c497_i32_34 dim 1 : vector<8x512xf32>, i32 -> vector<8x512xf32>
    %115 = vector.extract_strided_slice %0 {offsets = [6, 0], sizes = [1, 512], strides = [1, 1]} : vector<9x512xf32> to vector<1x512xf32>
    %116 = vector.broadcast %115 : vector<1x512xf32> to vector<8x512xf32>
    %117 = arith.mulf %114, %116 : vector<8x512xf32>
    %c496_i32_35 = arith.constant 496 : i32
    %118 = tpu.dynamic_rotate %93 by %c496_i32_35 dim 1 : vector<8x512xf32>, i32 -> vector<8x512xf32>
    %119 = vector.extract_strided_slice %0 {offsets = [7, 0], sizes = [1, 512], strides = [1, 1]} : vector<9x512xf32> to vector<1x512xf32>
    %120 = vector.broadcast %119 : vector<1x512xf32> to vector<8x512xf32>
    %121 = arith.mulf %118, %120 : vector<8x512xf32>
    %c495_i32_36 = arith.constant 495 : i32
    %122 = tpu.dynamic_rotate %93 by %c495_i32_36 dim 1 : vector<8x512xf32>, i32 -> vector<8x512xf32>
    %123 = vector.extract_strided_slice %0 {offsets = [8, 0], sizes = [1, 512], strides = [1, 1]} : vector<9x512xf32> to vector<1x512xf32>
    %124 = vector.broadcast %123 : vector<1x512xf32> to vector<8x512xf32>
    %125 = arith.mulf %122, %124 : vector<8x512xf32>
    %126 = tpu.concatenate %97, %101, %105, %109, %93, %113, %117, %121, %125 in 0 : vector<8x512xf32>, vector<8x512xf32>, vector<8x512xf32>, vector<8x512xf32>, vector<8x512xf32>, vector<8x512xf32>, vector<8x512xf32>, vector<8x512xf32>, vector<8x512xf32> -> vector<72x512xf32>
    %c0_37 = arith.constant 0 : index
    %c0_38 = arith.constant 0 : index
    %127 = vector.load %arg9[%c0_37, %c0_38] : memref<8x72xbf16, #tpu.memory_space<vmem>>, vector<8x72xbf16>
    %128 = arith.truncf %126 : vector<72x512xf32> to vector<72x512xbf16>
    %cst_39 = arith.constant dense<0.000000e+00> : vector<8x512xf32>
    %129 = tpu.matmul %127, %128, %cst_39 {dimension_numbers = #tpu.dot_dimension_numbers<[1], [0], [0], [1], [0, 0, 1, 1], [], []>} : vector<8x72xbf16>, vector<72x512xbf16>, vector<8x512xf32> -> vector<8x512xf32>
    %c0_40 = arith.constant 0 : index
    %c0_41 = arith.constant 0 : index
    %130 = vector.load %arg10[%c0_40, %c0_41] : memref<8x1xf32, #tpu.memory_space<vmem>>, vector<8x1xf32>
    %131 = vector.broadcast %130 : vector<8x1xf32> to vector<8x512xf32>
    %132 = arith.addf %129, %131 : vector<8x512xf32>
    %cst_42 = arith.constant 0.000000e+00 : f32
    %133 = vector.broadcast %cst_42 : f32 to vector<8x512xf32>
    %134 = arith.maximumf %132, %133 : vector<8x512xf32>
    %135 = arith.addf %51, %92 : vector<8x512xf32>
    %136 = arith.addf %135, %134 : vector<8x512xf32>
    %137 = vector.extract_strided_slice %136 {offsets = [0, 0], sizes = [8, 256], strides = [1, 1]} : vector<8x512xf32> to vector<8x256xf32>
    %138 = vector.extract_strided_slice %136 {offsets = [0, 256], sizes = [8, 256], strides = [1, 1]} : vector<8x512xf32> to vector<8x256xf32>
    %139 = arith.addf %137, %138 : vector<8x256xf32>
    %140 = vector.extract_strided_slice %136 {offsets = [0, 0], sizes = [8, 256], strides = [1, 1]} : vector<8x512xf32> to vector<8x256xf32>
    %141 = vector.extract_strided_slice %136 {offsets = [0, 256], sizes = [8, 256], strides = [1, 1]} : vector<8x512xf32> to vector<8x256xf32>
    %142 = arith.subf %140, %141 : vector<8x256xf32>
    %143 = math.absf %142 : vector<8x256xf32>
    %c0_43 = arith.constant 0 : index
    %c0_44 = arith.constant 0 : index
    %144 = vector.load %arg11[%c0_43, %c0_44] : memref<8x8xbf16, #tpu.memory_space<vmem>>, vector<8x8xbf16>
    %145 = arith.truncf %139 : vector<8x256xf32> to vector<8x256xbf16>
    %cst_45 = arith.constant dense<0.000000e+00> : vector<8x256xf32>
    %146 = tpu.matmul %144, %145, %cst_45 {dimension_numbers = #tpu.dot_dimension_numbers<[1], [0], [0], [1], [0, 0, 1, 1], [], []>} : vector<8x8xbf16>, vector<8x256xbf16>, vector<8x256xf32> -> vector<8x256xf32>
    %c0_46 = arith.constant 0 : index
    %c0_47 = arith.constant 0 : index
    %147 = vector.load %arg12[%c0_46, %c0_47] : memref<8x1xf32, #tpu.memory_space<vmem>>, vector<8x1xf32>
    %148 = vector.broadcast %147 : vector<8x1xf32> to vector<8x256xf32>
    %149 = arith.addf %146, %148 : vector<8x256xf32>
    %cst_48 = arith.constant 0.000000e+00 : f32
    %150 = vector.broadcast %cst_48 : f32 to vector<8x256xf32>
    %151 = arith.maximumf %149, %150 : vector<8x256xf32>
    %c0_49 = arith.constant 0 : index
    %c0_50 = arith.constant 0 : index
    %152 = vector.load %arg13[%c0_49, %c0_50] : memref<8x8xbf16, #tpu.memory_space<vmem>>, vector<8x8xbf16>
    %153 = arith.truncf %143 : vector<8x256xf32> to vector<8x256xbf16>
    %cst_51 = arith.constant dense<0.000000e+00> : vector<8x256xf32>
    %154 = tpu.matmul %152, %153, %cst_51 {dimension_numbers = #tpu.dot_dimension_numbers<[1], [0], [0], [1], [0, 0, 1, 1], [], []>} : vector<8x8xbf16>, vector<8x256xbf16>, vector<8x256xf32> -> vector<8x256xf32>
    %c0_52 = arith.constant 0 : index
    %c0_53 = arith.constant 0 : index
    %155 = vector.load %arg14[%c0_52, %c0_53] : memref<8x1xf32, #tpu.memory_space<vmem>>, vector<8x1xf32>
    %156 = vector.broadcast %155 : vector<8x1xf32> to vector<8x256xf32>
    %157 = arith.addf %154, %156 : vector<8x256xf32>
    %cst_54 = arith.constant 0.000000e+00 : f32
    %158 = vector.broadcast %cst_54 : f32 to vector<8x256xf32>
    %159 = arith.maximumf %157, %158 : vector<8x256xf32>
    %c17_i32_55 = arith.constant 17 : i32
    %160 = tpu.dynamic_rotate %159 by %c17_i32_55 dim 1 : vector<8x256xf32>, i32 -> vector<8x256xf32>
    %161 = vector.extract_strided_slice %0 {offsets = [0, 0], sizes = [1, 256], strides = [1, 1]} : vector<9x512xf32> to vector<1x256xf32>
    %162 = vector.broadcast %161 : vector<1x256xf32> to vector<8x256xf32>
    %163 = arith.mulf %160, %162 : vector<8x256xf32>
    %c16_i32_56 = arith.constant 16 : i32
    %164 = tpu.dynamic_rotate %159 by %c16_i32_56 dim 1 : vector<8x256xf32>, i32 -> vector<8x256xf32>
    %165 = vector.extract_strided_slice %0 {offsets = [1, 0], sizes = [1, 256], strides = [1, 1]} : vector<9x512xf32> to vector<1x256xf32>
    %166 = vector.broadcast %165 : vector<1x256xf32> to vector<8x256xf32>
    %167 = arith.mulf %164, %166 : vector<8x256xf32>
    %c15_i32_57 = arith.constant 15 : i32
    %168 = tpu.dynamic_rotate %159 by %c15_i32_57 dim 1 : vector<8x256xf32>, i32 -> vector<8x256xf32>
    %169 = vector.extract_strided_slice %0 {offsets = [2, 0], sizes = [1, 256], strides = [1, 1]} : vector<9x512xf32> to vector<1x256xf32>
    %170 = vector.broadcast %169 : vector<1x256xf32> to vector<8x256xf32>
    %171 = arith.mulf %168, %170 : vector<8x256xf32>
    %c1_i32_58 = arith.constant 1 : i32
    %172 = tpu.dynamic_rotate %159 by %c1_i32_58 dim 1 : vector<8x256xf32>, i32 -> vector<8x256xf32>
    %173 = vector.extract_strided_slice %0 {offsets = [3, 0], sizes = [1, 256], strides = [1, 1]} : vector<9x512xf32> to vector<1x256xf32>
    %174 = vector.broadcast %173 : vector<1x256xf32> to vector<8x256xf32>
    %175 = arith.mulf %172, %174 : vector<8x256xf32>
    %c255_i32 = arith.constant 255 : i32
    %176 = tpu.dynamic_rotate %159 by %c255_i32 dim 1 : vector<8x256xf32>, i32 -> vector<8x256xf32>
    %177 = vector.extract_strided_slice %0 {offsets = [5, 0], sizes = [1, 256], strides = [1, 1]} : vector<9x512xf32> to vector<1x256xf32>
    %178 = vector.broadcast %177 : vector<1x256xf32> to vector<8x256xf32>
    %179 = arith.mulf %176, %178 : vector<8x256xf32>
    %c241_i32 = arith.constant 241 : i32
    %180 = tpu.dynamic_rotate %159 by %c241_i32 dim 1 : vector<8x256xf32>, i32 -> vector<8x256xf32>
    %181 = vector.extract_strided_slice %0 {offsets = [6, 0], sizes = [1, 256], strides = [1, 1]} : vector<9x512xf32> to vector<1x256xf32>
    %182 = vector.broadcast %181 : vector<1x256xf32> to vector<8x256xf32>
    %183 = arith.mulf %180, %182 : vector<8x256xf32>
    %c240_i32 = arith.constant 240 : i32
    %184 = tpu.dynamic_rotate %159 by %c240_i32 dim 1 : vector<8x256xf32>, i32 -> vector<8x256xf32>
    %185 = vector.extract_strided_slice %0 {offsets = [7, 0], sizes = [1, 256], strides = [1, 1]} : vector<9x512xf32> to vector<1x256xf32>
    %186 = vector.broadcast %185 : vector<1x256xf32> to vector<8x256xf32>
    %187 = arith.mulf %184, %186 : vector<8x256xf32>
    %c239_i32 = arith.constant 239 : i32
    %188 = tpu.dynamic_rotate %159 by %c239_i32 dim 1 : vector<8x256xf32>, i32 -> vector<8x256xf32>
    %189 = vector.extract_strided_slice %0 {offsets = [8, 0], sizes = [1, 256], strides = [1, 1]} : vector<9x512xf32> to vector<1x256xf32>
    %190 = vector.broadcast %189 : vector<1x256xf32> to vector<8x256xf32>
    %191 = arith.mulf %188, %190 : vector<8x256xf32>
    %192 = tpu.concatenate %163, %167, %171, %175, %159, %179, %183, %187, %191 in 0 : vector<8x256xf32>, vector<8x256xf32>, vector<8x256xf32>, vector<8x256xf32>, vector<8x256xf32>, vector<8x256xf32>, vector<8x256xf32>, vector<8x256xf32>, vector<8x256xf32> -> vector<72x256xf32>
    %c0_59 = arith.constant 0 : index
    %c0_60 = arith.constant 0 : index
    %193 = vector.load %arg15[%c0_59, %c0_60] : memref<8x72xbf16, #tpu.memory_space<vmem>>, vector<8x72xbf16>
    %194 = arith.truncf %192 : vector<72x256xf32> to vector<72x256xbf16>
    %cst_61 = arith.constant dense<0.000000e+00> : vector<8x256xf32>
    %195 = tpu.matmul %193, %194, %cst_61 {dimension_numbers = #tpu.dot_dimension_numbers<[1], [0], [0], [1], [0, 0, 1, 1], [], []>} : vector<8x72xbf16>, vector<72x256xbf16>, vector<8x256xf32> -> vector<8x256xf32>
    %c0_62 = arith.constant 0 : index
    %c0_63 = arith.constant 0 : index
    %196 = vector.load %arg16[%c0_62, %c0_63] : memref<8x1xf32, #tpu.memory_space<vmem>>, vector<8x1xf32>
    %197 = vector.broadcast %196 : vector<8x1xf32> to vector<8x256xf32>
    %198 = arith.addf %195, %197 : vector<8x256xf32>
    %cst_64 = arith.constant 0.000000e+00 : f32
    %199 = vector.broadcast %cst_64 : f32 to vector<8x256xf32>
    %200 = arith.maximumf %198, %199 : vector<8x256xf32>
    %201 = arith.addf %200, %151 : vector<8x256xf32>
    %c0_65 = arith.constant 0 : index
    %c0_66 = arith.constant 0 : index
    %c0_67 = arith.constant 0 : index
    %202 = vector.load %arg17[%c0_65, %c0_66, %c0_67] : memref<1x8x256xf32, #tpu.memory_space<vmem>>, vector<1x8x256xf32>
    %203 = vector.shape_cast %202 : vector<1x8x256xf32> to vector<8x256xf32>
    %204 = vector.shape_cast %201 : vector<8x256xf32> to vector<1x8x256xf32>
    tpu.vector_store %arg17[%c0_65, %c0_66, %c0_67], %204 {strides = array<i32>} : memref<1x8x256xf32, #tpu.memory_space<vmem>>, vector<1x8x256xf32>,
    return
  }
  func.func @transform_0(%arg0: i32) -> (i32, i32, i32) {
    %c0_i32 = arith.constant 0 : i32
    %c0_i32_0 = arith.constant 0 : i32
    %c0_i32_1 = arith.constant 0 : i32
    return %arg0, %c0_i32, %c0_i32_0 : i32, i32, i32
  }
  func.func @transform_1(%arg0: i32) -> (i32, i32) {
    %c0_i32 = arith.constant 0 : i32
    %c0_i32_0 = arith.constant 0 : i32
    %c0_i32_1 = arith.constant 0 : i32
    return %c0_i32, %c0_i32_0 : i32, i32
  }
  func.func @transform_2(%arg0: i32) -> (i32, i32) {
    %c0_i32 = arith.constant 0 : i32
    %c0_i32_0 = arith.constant 0 : i32
    %c0_i32_1 = arith.constant 0 : i32
    return %c0_i32, %c0_i32_0 : i32, i32
  }
  func.func @transform_3(%arg0: i32) -> (i32, i32) {
    %c0_i32 = arith.constant 0 : i32
    %c0_i32_0 = arith.constant 0 : i32
    %c0_i32_1 = arith.constant 0 : i32
    return %c0_i32, %c0_i32_0 : i32, i32
  }
  func.func @transform_4(%arg0: i32) -> (i32, i32) {
    %c0_i32 = arith.constant 0 : i32
    %c0_i32_0 = arith.constant 0 : i32
    %c0_i32_1 = arith.constant 0 : i32
    return %c0_i32, %c0_i32_0 : i32, i32
  }
  func.func @transform_5(%arg0: i32) -> (i32, i32) {
    %c0_i32 = arith.constant 0 : i32
    %c0_i32_0 = arith.constant 0 : i32
    %c0_i32_1 = arith.constant 0 : i32
    return %c0_i32, %c0_i32_0 : i32, i32
  }
  func.func @transform_6(%arg0: i32) -> (i32, i32) {
    %c0_i32 = arith.constant 0 : i32
    %c0_i32_0 = arith.constant 0 : i32
    %c0_i32_1 = arith.constant 0 : i32
    return %c0_i32, %c0_i32_0 : i32, i32
  }
  func.func @transform_7(%arg0: i32) -> (i32, i32) {
    %c0_i32 = arith.constant 0 : i32
    %c0_i32_0 = arith.constant 0 : i32
    %c0_i32_1 = arith.constant 0 : i32
    return %c0_i32, %c0_i32_0 : i32, i32
  }
  func.func @transform_8(%arg0: i32) -> (i32, i32) {
    %c0_i32 = arith.constant 0 : i32
    %c0_i32_0 = arith.constant 0 : i32
    %c0_i32_1 = arith.constant 0 : i32
    return %c0_i32, %c0_i32_0 : i32, i32
  }
  func.func @transform_9(%arg0: i32) -> (i32, i32) {
    %c0_i32 = arith.constant 0 : i32
    %c0_i32_0 = arith.constant 0 : i32
    %c0_i32_1 = arith.constant 0 : i32
    return %c0_i32, %c0_i32_0 : i32, i32
  }
  func.func @transform_10(%arg0: i32) -> (i32, i32) {
    %c0_i32 = arith.constant 0 : i32
    %c0_i32_0 = arith.constant 0 : i32
    %c0_i32_1 = arith.constant 0 : i32
    return %c0_i32, %c0_i32_0 : i32, i32
  }
  func.func @transform_11(%arg0: i32) -> (i32, i32) {
    %c0_i32 = arith.constant 0 : i32
    %c0_i32_0 = arith.constant 0 : i32
    %c0_i32_1 = arith.constant 0 : i32
    return %c0_i32, %c0_i32_0 : i32, i32
  }
  func.func @transform_12(%arg0: i32) -> (i32, i32) {
    %c0_i32 = arith.constant 0 : i32
    %c0_i32_0 = arith.constant 0 : i32
    %c0_i32_1 = arith.constant 0 : i32
    return %c0_i32, %c0_i32_0 : i32, i32
  }
  func.func @transform_13(%arg0: i32) -> (i32, i32) {
    %c0_i32 = arith.constant 0 : i32
    %c0_i32_0 = arith.constant 0 : i32
    %c0_i32_1 = arith.constant 0 : i32
    return %c0_i32, %c0_i32_0 : i32, i32
  }
  func.func @transform_14(%arg0: i32) -> (i32, i32) {
    %c0_i32 = arith.constant 0 : i32
    %c0_i32_0 = arith.constant 0 : i32
    %c0_i32_1 = arith.constant 0 : i32
    return %c0_i32, %c0_i32_0 : i32, i32
  }
  func.func @transform_15(%arg0: i32) -> (i32, i32) {
    %c0_i32 = arith.constant 0 : i32
    %c0_i32_0 = arith.constant 0 : i32
    %c0_i32_1 = arith.constant 0 : i32
    return %c0_i32, %c0_i32_0 : i32, i32
  }
  func.func @transform_16(%arg0: i32) -> (i32, i32, i32) {
    %c0_i32 = arith.constant 0 : i32
    %c0_i32_0 = arith.constant 0 : i32
    %c0_i32_1 = arith.constant 0 : i32
    return %arg0, %c0_i32, %c0_i32_0 : i32, i32, i32
  }
}

</mosaic_0001>

<llo_original>
// kernel: tpu_custom_call.1
$region0: #{tpu_custom_call.1}
  #allocation0 [shape = 'u32[]', space=smem, size = 0x4, offset = 0x4, fixed_abs, tag = 'smem constant byte address 0x4 - core index']
  #allocation1 [shape = 'u32[144,128]{1,0:T(1,128)}', space=vmem, size = 0x12000, scoped, tag = 'internal scratch']
  %s0 = inlined_call_operand.hbm [shape: f32[2,8,512], index: 0, kind: input, shape index: {}]
  %s1 = inlined_call_operand.vmem [shape: f32[9,512], index: 1, kind: input, shape index: {}]
  %s2 = inlined_call_operand.vmem [shape: bf16[8,8], index: 2, kind: input, shape index: {}]
  %s3 = inlined_call_operand.vmem [shape: f32[8,1], index: 3, kind: input, shape index: {}]
  %s4 = inlined_call_operand.vmem [shape: bf16[8,72], index: 4, kind: input, shape index: {}]
  %s5 = inlined_call_operand.vmem [shape: f32[8,1], index: 5, kind: input, shape index: {}]
  %s6 = inlined_call_operand.vmem [shape: bf16[8,72], index: 6, kind: input, shape index: {}]
  %s7 = inlined_call_operand.vmem [shape: f32[8,1], index: 7, kind: input, shape index: {}]
  %s8 = inlined_call_operand.vmem [shape: bf16[8,72], index: 8, kind: input, shape index: {}]
  %s9 = inlined_call_operand.vmem [shape: f32[8,1], index: 9, kind: input, shape index: {}]
  %s10 = inlined_call_operand.vmem [shape: bf16[8,8], index: 10, kind: input, shape index: {}]
  %s11 = inlined_call_operand.vmem [shape: f32[8,1], index: 11, kind: input, shape index: {}]
  %s12 = inlined_call_operand.vmem [shape: bf16[8,8], index: 12, kind: input, shape index: {}]
  %s13 = inlined_call_operand.vmem [shape: f32[8,1], index: 13, kind: input, shape index: {}]
  %s14 = inlined_call_operand.vmem [shape: bf16[8,72], index: 14, kind: input, shape index: {}]
  %s15 = inlined_call_operand.vmem [shape: f32[8,1], index: 15, kind: input, shape index: {}]
  %s16 = inlined_call_operand.hbm [shape: f32[2,8,256], index: 16, kind: output, shape index: {}]
  %s17 = sld [smem:[#allocation0]]
  $region101: #{tpu_custom_call.1} parent=0
    _
  %s19 = ssub.s32 1, %s17
  %s20 = scalar_select 0, %s19, %s17
  $region1: #{tpu_custom_call.1} parent=0
    #allocation2 [shape = 'u8[32768]{0}', space=vmem, size = 0x8000, scoped, tag = 'input window, operand 0']
    #allocation3 [shape = 's32[2]{0}', space=sflag, size = 0x8, scoped, tag = 'scoped memory for tpu_custom_call.1']
    #allocation4 [shape = 's32[2]{0}', space=sflag, size = 0x8, scoped, tag = 'scoped memory for tpu_custom_call.1']
    #allocation5 [shape = 'u8[16384]{0}', space=vmem, size = 0x4000, scoped, tag = 'output window, operand 0']
    %21 = vsyncpa [#allocation3], 0
    %s22 = scalar_lea.sflag [#allocation3], 1
    %23 = vsyncpa %s22, 0
    %24 = vsyncpa [#allocation4], 0
    %s25 = scalar_lea.sflag [#allocation4], 1
    %26 = vsyncpa %s25, 0
    loop: start=0, step=1, limit=4
    $region2: #{tpu_custom_call.1} parent=1 // loop_pre_header
      _
    $region3: #{tpu_custom_call.1} parent=1 // loop_header
      %s28 = sphi 0, %s32
      %p29 = scmp.ge.s32.totalorder %s28, 4
      %s38 = sphi 0, %s40
      %s41 = sphi 0, %s38
      %s42 = sphi 0, %s41
      %s58 = sphi 0, %s42
      %s62 = sphi 0, %s62
      %s64 = sphi 0, %s62
      %s65 = sphi 0, %s64
      %s79 = sphi 0, %s65
      %s83 = sphi 0, %s83
      %s85 = sphi 0, %s83
      %s86 = sphi 0, %s85
      %s100 = sphi 0, %s86
      %s104 = sphi 0, %s104
      %s106 = sphi 0, %s104
      %s107 = sphi 0, %s106
      %s121 = sphi 0, %s107
      %s125 = sphi 0, %s125
      %s127 = sphi 0, %s125
      %s128 = sphi 0, %s127
      %s142 = sphi 0, %s128
      %s146 = sphi 0, %s146
      %s148 = sphi 0, %s146
      %s149 = sphi 0, %s148
      %s163 = sphi 0, %s149
      %s167 = sphi 0, %s167
      %s169 = sphi 0, %s167
      %s170 = sphi 0, %s169
      %s184 = sphi 0, %s170
      %s188 = sphi 0, %s188
      %s190 = sphi 0, %s188
      %s191 = sphi 0, %s190
      %s205 = sphi 0, %s191
      %s209 = sphi 0, %s209
      %s211 = sphi 0, %s209
      %s212 = sphi 0, %s211
      %s226 = sphi 0, %s212
      %s230 = sphi 0, %s230
      %s232 = sphi 0, %s230
      %s233 = sphi 0, %s232
      %s247 = sphi 0, %s233
      %s251 = sphi 0, %s251
      %s253 = sphi 0, %s251
      %s254 = sphi 0, %s253
      %s268 = sphi 0, %s254
      %s272 = sphi 0, %s272
      %s274 = sphi 0, %s272
      %s275 = sphi 0, %s274
      %s289 = sphi 0, %s275
      %s293 = sphi 0, %s293
      %s295 = sphi 0, %s293
      %s296 = sphi 0, %s295
      %s310 = sphi 0, %s296
      %s314 = sphi 0, %s314
      %s316 = sphi 0, %s314
      %s317 = sphi 0, %s316
      %s331 = sphi 0, %s317
      %s335 = sphi 0, %s335
      %s337 = sphi 0, %s335
      %s338 = sphi 0, %s337
      %s352 = sphi 0, %s338
      %s356 = sphi 0, %s356
      %s358 = sphi 0, %s356
      %s359 = sphi 0, %s358
      %s373 = sphi 0, %s359
      %s379 = sphi 0, %s381
      %s382 = sphi 0, %s379
      %s383 = sphi 0, %s382
      %s399 = sphi 0, %s383
    $region4: #{tpu_custom_call.1} parent=1 // loop_header_branch
      %31 = sbr.rel (%p29) target = $region8
    $region5: #{tpu_custom_call.1} parent=1 // loop_body
      %s33 = ssub.s32 %s28, 1
      %s34 = ssub.s32 %s28, 2
      %s35 = sadd.s32 %s28, 1
      %s36 = ssub.s32 %s28, %s35
      %p37 = scmp.eq.s32.totalorder %s36, 0
      %s39 = sadd.s32 %s38, 1
      %s40 = scalar_select %p37, %s38, %s39
      %p43 = pneg %p37
      %p44 = scmp.eq.s32.totalorder %s28, 1
      %p45 = por %p43, %p44
      %p46 = scmp.ne.s32.totalorder %s38, %s41
      %p47 = scmp.eq.s32.totalorder %s28, 0
      %p48 = por %p46, %p47
      %p49 = scmp.ne.s32.totalorder %s38, %s41
      %p50 = scmp.eq.s32.totalorder %s33, 1
      %p51 = por %p49, %p50
      %p52 = scmp.ne.s32.totalorder %s41, %s42
      %p53 = scmp.eq.s32.totalorder %s33, 0
      %p54 = por %p52, %p53
      %p55 = scmp.ne.s32.totalorder %s41, %s42
      %p56 = scmp.eq.s32.totalorder %s34, 1
      %p57 = por %p55, %p56
      %p59 = scmp.ne.s32.totalorder %s42, %s58
      %p60 = scmp.eq.s32.totalorder %s34, 0
      %p61 = por %p59, %p60
      %s63 = sadd.s32 %s62, 1
      %p66 = scmp.eq.s32.totalorder %s28, 1
      %p67 = scmp.ne.s32.totalorder %s62, %s64
      %p68 = scmp.eq.s32.totalorder %s28, 0
      %p69 = por %p67, %p68
      %p70 = scmp.ne.s32.totalorder %s62, %s64
      %p71 = scmp.eq.s32.totalorder %s33, 1
      %p72 = por %p70, %p71
      %p73 = scmp.ne.s32.totalorder %s64, %s65
      %p74 = scmp.eq.s32.totalorder %s33, 0
      %p75 = por %p73, %p74
      %p76 = scmp.ne.s32.totalorder %s64, %s65
      %p77 = scmp.eq.s32.totalorder %s34, 1
      %p78 = por %p76, %p77
      %p80 = scmp.ne.s32.totalorder %s65, %s79
      %p81 = scmp.eq.s32.totalorder %s34, 0
      %p82 = por %p80, %p81
      %s84 = sadd.s32 %s83, 1
      %p87 = scmp.eq.s32.totalorder %s28, 1
      %p88 = scmp.ne.s32.totalorder %s83, %s85
      %p89 = scmp.eq.s32.totalorder %s28, 0
      %p90 = por %p88, %p89
      %p91 = scmp.ne.s32.totalorder %s83, %s85
      %p92 = scmp.eq.s32.totalorder %s33, 1
      %p93 = por %p91, %p92
      %p94 = scmp.ne.s32.totalorder %s85, %s86
      %p95 = scmp.eq.s32.totalorder %s33, 0
      %p96 = por %p94, %p95
      %p97 = scmp.ne.s32.totalorder %s85, %s86
      %p98 = scmp.eq.s32.totalorder %s34, 1
      %p99 = por %p97, %p98
      %p101 = scmp.ne.s32.totalorder %s86, %s100
      %p102 = scmp.eq.s32.totalorder %s34, 0
      %p103 = por %p101, %p102
      %s105 = sadd.s32 %s104, 1
      %p108 = scmp.eq.s32.totalorder %s28, 1
      %p109 = scmp.ne.s32.totalorder %s104, %s106
      %p110 = scmp.eq.s32.totalorder %s28, 0
      %p111 = por %p109, %p110
      %p112 = scmp.ne.s32.totalorder %s104, %s106
      %p113 = scmp.eq.s32.totalorder %s33, 1
      %p114 = por %p112, %p113
      %p115 = scmp.ne.s32.totalorder %s106, %s107
      %p116 = scmp.eq.s32.totalorder %s33, 0
      %p117 = por %p115, %p116
      %p118 = scmp.ne.s32.totalorder %s106, %s107
      %p119 = scmp.eq.s32.totalorder %s34, 1
      %p120 = por %p118, %p119
      %p122 = scmp.ne.s32.totalorder %s107, %s121
      %p123 = scmp.eq.s32.totalorder %s34, 0
      %p124 = por %p122, %p123
      %s126 = sadd.s32 %s125, 1
      %p129 = scmp.eq.s32.totalorder %s28, 1
      %p130 = scmp.ne.s32.totalorder %s125, %s127
      %p131 = scmp.eq.s32.totalorder %s28, 0
      %p132 = por %p130, %p131
      %p133 = scmp.ne.s32.totalorder %s125, %s127
      %p134 = scmp.eq.s32.totalorder %s33, 1
      %p135 = por %p133, %p134
      %p136 = scmp.ne.s32.totalorder %s127, %s128
      %p137 = scmp.eq.s32.totalorder %s33, 0
      %p138 = por %p136, %p137
      %p139 = scmp.ne.s32.totalorder %s127, %s128
      %p140 = scmp.eq.s32.totalorder %s34, 1
      %p141 = por %p139, %p140
      %p143 = scmp.ne.s32.totalorder %s128, %s142
      %p144 = scmp.eq.s32.totalorder %s34, 0
      %p145 = por %p143, %p144
      %s147 = sadd.s32 %s146, 1
      %p150 = scmp.eq.s32.totalorder %s28, 1
      %p151 = scmp.ne.s32.totalorder %s146, %s148
      %p152 = scmp.eq.s32.totalorder %s28, 0
      %p153 = por %p151, %p152
      %p154 = scmp.ne.s32.totalorder %s146, %s148
      %p155 = scmp.eq.s32.totalorder %s33, 1
      %p156 = por %p154, %p155
      %p157 = scmp.ne.s32.totalorder %s148, %s149
      %p158 = scmp.eq.s32.totalorder %s33, 0
      %p159 = por %p157, %p158
      %p160 = scmp.ne.s32.totalorder %s148, %s149
      %p161 = scmp.eq.s32.totalorder %s34, 1
      %p162 = por %p160, %p161
      %p164 = scmp.ne.s32.totalorder %s149, %s163
      %p165 = scmp.eq.s32.totalorder %s34, 0
      %p166 = por %p164, %p165
      %s168 = sadd.s32 %s167, 1
      %p171 = scmp.eq.s32.totalorder %s28, 1
      %p172 = scmp.ne.s32.totalorder %s167, %s169
      %p173 = scmp.eq.s32.totalorder %s28, 0
      %p174 = por %p172, %p173
      %p175 = scmp.ne.s32.totalorder %s167, %s169
      %p176 = scmp.eq.s32.totalorder %s33, 1
      %p177 = por %p175, %p176
      %p178 = scmp.ne.s32.totalorder %s169, %s170
      %p179 = scmp.eq.s32.totalorder %s33, 0
      %p180 = por %p178, %p179
      %p181 = scmp.ne.s32.totalorder %s169, %s170
      %p182 = scmp.eq.s32.totalorder %s34, 1
      %p183 = por %p181, %p182
      %p185 = scmp.ne.s32.totalorder %s170, %s184
      %p186 = scmp.eq.s32.totalorder %s34, 0
      %p187 = por %p185, %p186
      %s189 = sadd.s32 %s188, 1
      %p192 = scmp.eq.s32.totalorder %s28, 1
      %p193 = scmp.ne.s32.totalorder %s188, %s190
      %p194 = scmp.eq.s32.totalorder %s28, 0
      %p195 = por %p193, %p194
      %p196 = scmp.ne.s32.totalorder %s188, %s190
      %p197 = scmp.eq.s32.totalorder %s33, 1
      %p198 = por %p196, %p197
      %p199 = scmp.ne.s32.totalorder %s190, %s191
      %p200 = scmp.eq.s32.totalorder %s33, 0
      %p201 = por %p199, %p200
      %p202 = scmp.ne.s32.totalorder %s190, %s191
      %p203 = scmp.eq.s32.totalorder %s34, 1
      %p204 = por %p202, %p203
      %p206 = scmp.ne.s32.totalorder %s191, %s205
      %p207 = scmp.eq.s32.totalorder %s34, 0
      %p208 = por %p206, %p207
      %s210 = sadd.s32 %s209, 1
      %p213 = scmp.eq.s32.totalorder %s28, 1
      %p214 = scmp.ne.s32.totalorder %s209, %s211
      %p215 = scmp.eq.s32.totalorder %s28, 0
      %p216 = por %p214, %p215
      %p217 = scmp.ne.s32.totalorder %s209, %s211
      %p218 = scmp.eq.s32.totalorder %s33, 1
      %p219 = por %p217, %p218
      %p220 = scmp.ne.s32.totalorder %s211, %s212
      %p221 = scmp.eq.s32.totalorder %s33, 0
      %p222 = por %p220, %p221
      %p223 = scmp.ne.s32.totalorder %s211, %s212
      %p224 = scmp.eq.s32.totalorder %s34, 1
      %p225 = por %p223, %p224
      %p227 = scmp.ne.s32.totalorder %s212, %s226
      %p228 = scmp.eq.s32.totalorder %s34, 0
      %p229 = por %p227, %p228
      %s231 = sadd.s32 %s230, 1
      %p234 = scmp.eq.s32.totalorder %s28, 1
      %p235 = scmp.ne.s32.totalorder %s230, %s232
      %p236 = scmp.eq.s32.totalorder %s28, 0
      %p237 = por %p235, %p236
      %p238 = scmp.ne.s32.totalorder %s230, %s232
      %p239 = scmp.eq.s32.totalorder %s33, 1
      %p240 = por %p238, %p239
      %p241 = scmp.ne.s32.totalorder %s232, %s233
      %p242 = scmp.eq.s32.totalorder %s33, 0
      %p243 = por %p241, %p242
      %p244 = scmp.ne.s32.totalorder %s232, %s233
      %p245 = scmp.eq.s32.totalorder %s34, 1
      %p246 = por %p244, %p245
      %p248 = scmp.ne.s32.totalorder %s233, %s247
      %p249 = scmp.eq.s32.totalorder %s34, 0
      %p250 = por %p248, %p249
      %s252 = sadd.s32 %s251, 1
      %p255 = scmp.eq.s32.totalorder %s28, 1
      %p256 = scmp.ne.s32.totalorder %s251, %s253
      %p257 = scmp.eq.s32.totalorder %s28, 0
      %p258 = por %p256, %p257
      %p259 = scmp.ne.s32.totalorder %s251, %s253
      %p260 = scmp.eq.s32.totalorder %s33, 1
      %p261 = por %p259, %p260
      %p262 = scmp.ne.s32.totalorder %s253, %s254
      %p263 = scmp.eq.s32.totalorder %s33, 0
      %p264 = por %p262, %p263
      %p265 = scmp.ne.s32.totalorder %s253, %s254
      %p266 = scmp.eq.s32.totalorder %s34, 1
      %p267 = por %p265, %p266
      %p269 = scmp.ne.s32.totalorder %s254, %s268
      %p270 = scmp.eq.s32.totalorder %s34, 0
      %p271 = por %p269, %p270
      %s273 = sadd.s32 %s272, 1
      %p276 = scmp.eq.s32.totalorder %s28, 1
      %p277 = scmp.ne.s32.totalorder %s272, %s274
      %p278 = scmp.eq.s32.totalorder %s28, 0
      %p279 = por %p277, %p278
      %p280 = scmp.ne.s32.totalorder %s272, %s274
      %p281 = scmp.eq.s32.totalorder %s33, 1
      %p282 = por %p280, %p281
      %p283 = scmp.ne.s32.totalorder %s274, %s275
      %p284 = scmp.eq.s32.totalorder %s33, 0
      %p285 = por %p283, %p284
      %p286 = scmp.ne.s32.totalorder %s274, %s275
      %p287 = scmp.eq.s32.totalorder %s34, 1
      %p288 = por %p286, %p287
      %p290 = scmp.ne.s32.totalorder %s275, %s289
      %p291 = scmp.eq.s32.totalorder %s34, 0
      %p292 = por %p290, %p291
      %s294 = sadd.s32 %s293, 1
      %p297 = scmp.eq.s32.totalorder %s28, 1
      %p298 = scmp.ne.s32.totalorder %s293, %s295
      %p299 = scmp.eq.s32.totalorder %s28, 0
      %p300 = por %p298, %p299
      %p301 = scmp.ne.s32.totalorder %s293, %s295
      %p302 = scmp.eq.s32.totalorder %s33, 1
      %p303 = por %p301, %p302
      %p304 = scmp.ne.s32.totalorder %s295, %s296
      %p305 = scmp.eq.s32.totalorder %s33, 0
      %p306 = por %p304, %p305
      %p307 = scmp.ne.s32.totalorder %s295, %s296
      %p308 = scmp.eq.s32.totalorder %s34, 1
      %p309 = por %p307, %p308
      %p311 = scmp.ne.s32.totalorder %s296, %s310
      %p312 = scmp.eq.s32.totalorder %s34, 0
      %p313 = por %p311, %p312
      %s315 = sadd.s32 %s314, 1
      %p318 = scmp.eq.s32.totalorder %s28, 1
      %p319 = scmp.ne.s32.totalorder %s314, %s316
      %p320 = scmp.eq.s32.totalorder %s28, 0
      %p321 = por %p319, %p320
      %p322 = scmp.ne.s32.totalorder %s314, %s316
      %p323 = scmp.eq.s32.totalorder %s33, 1
      %p324 = por %p322, %p323
      %p325 = scmp.ne.s32.totalorder %s316, %s317
      %p326 = scmp.eq.s32.totalorder %s33, 0
      %p327 = por %p325, %p326
      %p328 = scmp.ne.s32.totalorder %s316, %s317
      %p329 = scmp.eq.s32.totalorder %s34, 1
      %p330 = por %p328, %p329
      %p332 = scmp.ne.s32.totalorder %s317, %s331
      %p333 = scmp.eq.s32.totalorder %s34, 0
      %p334 = por %p332, %p333
      %s336 = sadd.s32 %s335, 1
      %p339 = scmp.eq.s32.totalorder %s28, 1
      %p340 = scmp.ne.s32.totalorder %s335, %s337
      %p341 = scmp.eq.s32.totalorder %s28, 0
      %p342 = por %p340, %p341
      %p343 = scmp.ne.s32.totalorder %s335, %s337
      %p344 = scmp.eq.s32.totalorder %s33, 1
      %p345 = por %p343, %p344
      %p346 = scmp.ne.s32.totalorder %s337, %s338
      %p347 = scmp.eq.s32.totalorder %s33, 0
      %p348 = por %p346, %p347
      %p349 = scmp.ne.s32.totalorder %s337, %s338
      %p350 = scmp.eq.s32.totalorder %s34, 1
      %p351 = por %p349, %p350
      %p353 = scmp.ne.s32.totalorder %s338, %s352
      %p354 = scmp.eq.s32.totalorder %s34, 0
      %p355 = por %p353, %p354
      %s357 = sadd.s32 %s356, 1
      %p360 = scmp.eq.s32.totalorder %s28, 1
      %p361 = scmp.ne.s32.totalorder %s356, %s358
      %p362 = scmp.eq.s32.totalorder %s28, 0
      %p363 = por %p361, %p362
      %p364 = scmp.ne.s32.totalorder %s356, %s358
      %p365 = scmp.eq.s32.totalorder %s33, 1
      %p366 = por %p364, %p365
      %p367 = scmp.ne.s32.totalorder %s358, %s359
      %p368 = scmp.eq.s32.totalorder %s33, 0
      %p369 = por %p367, %p368
      %p370 = scmp.ne.s32.totalorder %s358, %s359
      %p371 = scmp.eq.s32.totalorder %s34, 1
      %p372 = por %p370, %p371
      %p374 = scmp.ne.s32.totalorder %s359, %s373
      %p375 = scmp.eq.s32.totalorder %s34, 0
      %p376 = por %p374, %p375
      %s377 = ssub.s32 %s28, %s35
      %p378 = scmp.eq.s32.totalorder %s377, 0
      %s380 = sadd.s32 %s379, 1
      %s381 = scalar_select %p378, %s379, %s380
      %p384 = pneg %p378
      %p385 = scmp.eq.s32.totalorder %s28, 1
      %p386 = por %p384, %p385
      %p387 = scmp.ne.s32.totalorder %s379, %s382
      %p388 = scmp.eq.s32.totalorder %s28, 0
      %p389 = por %p387, %p388
      %p390 = scmp.ne.s32.totalorder %s379, %s382
      %p391 = scmp.eq.s32.totalorder %s33, 1
      %p392 = por %p390, %p391
      %p393 = scmp.ne.s32.totalorder %s382, %s383
      %p394 = scmp.eq.s32.totalorder %s33, 0
      %p395 = por %p393, %p394
      %p396 = scmp.ne.s32.totalorder %s382, %s383
      %p397 = scmp.eq.s32.totalorder %s34, 1
      %p398 = por %p396, %p397
      %p400 = scmp.ne.s32.totalorder %s383, %s399
      %p401 = scmp.eq.s32.totalorder %s34, 0
      %p402 = por %p400, %p401
      %p403 = scmp.le.s32.totalorder 1, %s28
      %p404 = scmp.lt.s32.totalorder %s28, 3
      %p405 = pnand %p403, %p404
      %p406 = pneg %p405
      // Predicated region
      $region9: #{tpu_custom_call.1} parent=5 // pred_check
        _
      $region10: #{tpu_custom_call.1} parent=5 // pred_check_branch
        %408 = sbr.rel (%p405) target = $region12
      $region11: #{tpu_custom_call.1} parent=5 // pred_region
        %s409 = ssub.s32 %s28, 1
        // Predicated region
        $region13: #{tpu_custom_call.1} parent=11 // pred_check
          %p410 = pneg %p75
        $region14: #{tpu_custom_call.1} parent=11 // pred_check_branch
          %412 = sbr.rel (%p410) target = $region16
        $region15: #{tpu_custom_call.1} parent=11 // pred_region
          _
        $region16: #{tpu_custom_call.1} parent=11 // pred_fallthru
          _
        // Predicated region
        $region17: #{tpu_custom_call.1} parent=11 // pred_check
          %p413 = pneg %p96
        $region18: #{tpu_custom_call.1} parent=11 // pred_check_branch
          %415 = sbr.rel (%p413) target = $region20
        $region19: #{tpu_custom_call.1} parent=11 // pred_region
          _
        $region20: #{tpu_custom_call.1} parent=11 // pred_fallthru
          _
        // Predicated region
        $region21: #{tpu_custom_call.1} parent=11 // pred_check
          %p416 = pneg %p117
        $region22: #{tpu_custom_call.1} parent=11 // pred_check_branch
          %418 = sbr.rel (%p416) target = $region24
        $region23: #{tpu_custom_call.1} parent=11 // pred_region
          _
        $region24: #{tpu_custom_call.1} parent=11 // pred_fallthru
          _
        // Predicated region
        $region25: #{tpu_custom_call.1} parent=11 // pred_check
          %p419 = pneg %p138
        $region26: #{tpu_custom_call.1} parent=11 // pred_check_branch
          %421 = sbr.rel (%p419) target = $region28
        $region27: #{tpu_custom_call.1} parent=11 // pred_region
          _
        $region28: #{tpu_custom_call.1} parent=11 // pred_fallthru
          _
        // Predicated region
        $region29: #{tpu_custom_call.1} parent=11 // pred_check
          %p422 = pneg %p159
        $region30: #{tpu_custom_call.1} parent=11 // pred_check_branch
          %424 = sbr.rel (%p422) target = $region32
        $region31: #{tpu_custom_call.1} parent=11 // pred_region
          _
        $region32: #{tpu_custom_call.1} parent=11 // pred_fallthru
          _
        // Predicated region
        $region33: #{tpu_custom_call.1} parent=11 // pred_check
          %p425 = pneg %p180
        $region34: #{tpu_custom_call.1} parent=11 // pred_check_branch
          %427 = sbr.rel (%p425) target = $region36
        $region35: #{tpu_custom_call.1} parent=11 // pred_region
          _
        $region36: #{tpu_custom_call.1} parent=11 // pred_fallthru
          _
        // Predicated region
        $region37: #{tpu_custom_call.1} parent=11 // pred_check
          %p428 = pneg %p201
        $region38: #{tpu_custom_call.1} parent=11 // pred_check_branch
          %430 = sbr.rel (%p428) target = $region40
        $region39: #{tpu_custom_call.1} parent=11 // pred_region
          _
        $region40: #{tpu_custom_call.1} parent=11 // pred_fallthru
          _
        // Predicated region
        $region41: #{tpu_custom_call.1} parent=11 // pred_check
          %p431 = pneg %p222
        $region42: #{tpu_custom_call.1} parent=11 // pred_check_branch
          %433 = sbr.rel (%p431) target = $region44
        $region43: #{tpu_custom_call.1} parent=11 // pred_region
          _
        $region44: #{tpu_custom_call.1} parent=11 // pred_fallthru
          _
        // Predicated region
        $region45: #{tpu_custom_call.1} parent=11 // pred_check
          %p434 = pneg %p243
        $region46: #{tpu_custom_call.1} parent=11 // pred_check_branch
          %436 = sbr.rel (%p434) target = $region48
        $region47: #{tpu_custom_call.1} parent=11 // pred_region
          _
        $region48: #{tpu_custom_call.1} parent=11 // pred_fallthru
          _
        // Predicated region
        $region49: #{tpu_custom_call.1} parent=11 // pred_check
          %p437 = pneg %p264
        $region50: #{tpu_custom_call.1} parent=11 // pred_check_branch
          %439 = sbr.rel (%p437) target = $region52
        $region51: #{tpu_custom_call.1} parent=11 // pred_region
          _
        $region52: #{tpu_custom_call.1} parent=11 // pred_fallthru
          _
        // Predicated region
        $region53: #{tpu_custom_call.1} parent=11 // pred_check
          %p440 = pneg %p285
        $region54: #{tpu_custom_call.1} parent=11 // pred_check_branch
          %442 = sbr.rel (%p440) target = $region56
        $region55: #{tpu_custom_call.1} parent=11 // pred_region
          _
        $region56: #{tpu_custom_call.1} parent=11 // pred_fallthru
          _
        // Predicated region
        $region57: #{tpu_custom_call.1} parent=11 // pred_check
          %p443 = pneg %p306
        $region58: #{tpu_custom_call.1} parent=11 // pred_check_branch
          %445 = sbr.rel (%p443) target = $region60
        $region59: #{tpu_custom_call.1} parent=11 // pred_region
          _
        $region60: #{tpu_custom_call.1} parent=11 // pred_fallthru
          _
        // Predicated region
        $region61: #{tpu_custom_call.1} parent=11 // pred_check
          %p446 = pneg %p327
        $region62: #{tpu_custom_call.1} parent=11 // pred_check_branch
          %448 = sbr.rel (%p446) target = $region64
        $region63: #{tpu_custom_call.1} parent=11 // pred_region
          _
        $region64: #{tpu_custom_call.1} parent=11 // pred_fallthru
          _
        // Predicated region
        $region65: #{tpu_custom_call.1} parent=11 // pred_check
          %p449 = pneg %p348
        $region66: #{tpu_custom_call.1} parent=11 // pred_check_branch
          %451 = sbr.rel (%p449) target = $region68
        $region67: #{tpu_custom_call.1} parent=11 // pred_region
          _
        $region68: #{tpu_custom_call.1} parent=11 // pred_fallthru
          _
        // Predicated region
        $region69: #{tpu_custom_call.1} parent=11 // pred_check
          %p452 = pneg %p369
        $region70: #{tpu_custom_call.1} parent=11 // pred_check_branch
          %454 = sbr.rel (%p452) target = $region72
        $region71: #{tpu_custom_call.1} parent=11 // pred_region
          _
        $region72: #{tpu_custom_call.1} parent=11 // pred_fallthru
          _
      $region12: #{tpu_custom_call.1} parent=5 // pred_fallthru
        _
      %p455 = scmp.lt.s32.totalorder %s28, 2
      // Predicated region
      $region73: #{tpu_custom_call.1} parent=5 // pred_check
        %p456 = pneg %p455
      $region74: #{tpu_custom_call.1} parent=5 // pred_check_branch
        %458 = sbr.rel (%p456) target = $region76
      $region75: #{tpu_custom_call.1} parent=5 // pred_region
        // Predicated region
        $region77: #{tpu_custom_call.1} parent=75 // pred_check
          %p459 = pneg %p48
        $region78: #{tpu_custom_call.1} parent=75 // pred_check_branch
          %461 = sbr.rel (%p459) target = $region80
        $region79: #{tpu_custom_call.1} parent=75 // pred_region
          %s462 = sand.u32 %s38, 1
          %s463 = scalar_lea.sflag [#allocation3], %s462
          %s464 = sand.u32 %s38, 1
          %s465 = smul.addr %s464, 32
          %s466 = scalar_lea.vmem [#allocation2], %s465
          %s468 = ssub.s32 512, 512
          %469 = vsyncadd %s463, %s468
          %s470 = smul.addr %s28, 4
          %s471 = smul.addr %s470, 128
          %s472 = scalar_lea.hbm %s0, %s471
          %s474 = sshll.u32 %s466, 4
          %s475 = int_to_ptr.vmem [resolvable:$true] %s474
          %477 = dma.hbm_to_vmem [thread:$0]  %s472, 512, %s475, %s463
        $region80: #{tpu_custom_call.1} parent=75 // pred_fallthru
          _
      $region76: #{tpu_custom_call.1} parent=5 // pred_fallthru
        _
      %p478 = scmp.le.s32.totalorder 1, %s28
      %p479 = scmp.lt.s32.totalorder %s28, 3
      %p480 = pnand %p478, %p479
      %p481 = pneg %p480
      // Predicated region
      $region81: #{tpu_custom_call.1} parent=5 // pred_check
        _
      $region82: #{tpu_custom_call.1} parent=5 // pred_check_branch
        %483 = sbr.rel (%p480) target = $region84
      $region83: #{tpu_custom_call.1} parent=5 // pred_region
        %s484 = ssub.s32 %s28, 1
        %s485 = sand.u32 %s41, 1
        %s486 = scalar_lea.sflag [#allocation3], %s485
        %s487 = sand.u32 %s41, 1
        %s488 = smul.addr %s487, 32
        %s489 = scalar_lea.vmem [#allocation2], %s488
        // Predicated region
        $region85: #{tpu_custom_call.1} parent=83 // pred_check
          %p490 = pneg %p54
        $region86: #{tpu_custom_call.1} parent=83 // pred_check_branch
          %492 = sbr.rel (%p490) target = $region88
        $region87: #{tpu_custom_call.1} parent=83 // pred_region
          %493 = dma.done %s486, 512
        $region88: #{tpu_custom_call.1} parent=83 // pred_fallthru
          _
        %s494 = sand.u32 %s41, 1
        %s495 = scalar_lea.sflag [#allocation3], %s494
        %s496 = sand.u32 %s41, 1
        %s497 = smul.addr %s496, 32
        %s498 = scalar_lea.vmem [#allocation2], %s497
        %p499 = pneg %p54
        %p500 = pneg %p51
        %p501 = pneg %p75
        %p502 = pneg %p72
        %p503 = pneg %p96
        %p504 = pneg %p93
        %p505 = pneg %p117
        %p506 = pneg %p114
        %p507 = pneg %p138
        %p508 = pneg %p135
        %p509 = pneg %p159
        %p510 = pneg %p156
        %p511 = pneg %p180
        %p512 = pneg %p177
        %p513 = pneg %p201
        %p514 = pneg %p198
        %p515 = pneg %p222
        %p516 = pneg %p219
        %p517 = pneg %p243
        %p518 = pneg %p240
        %p519 = pneg %p264
        %p520 = pneg %p261
        %p521 = pneg %p285
        %p522 = pneg %p282
        %p523 = pneg %p306
        %p524 = pneg %p303
        %p525 = pneg %p327
        %p526 = pneg %p324
        %p527 = pneg %p348
        %p528 = pneg %p345
        %p529 = pneg %p369
        %p530 = pneg %p366
        %p531 = pneg %p395
        %p532 = pneg %p392
        %s533 = sand.u32 %s382, 1
        %s534 = scalar_lea.sflag [#allocation4], %s533
        %s535 = sand.u32 %s382, 1
        %s536 = smul.addr %s535, 16
        %s537 = scalar_lea.vmem [#allocation5], %s536
        %v539 = vld [vmem:[%s1] sm:$0xff]
        %v540 = vld [vmem:[%s1 + $0x8] sm:$0xff]
        %v541 = vld [vmem:[%s1 + $0x10] sm:$0xff]
        %v542 = vld [vmem:[%s1 + $0x18] sm:$0xff]
        %v543 = vld [vmem:[%s1 + $0x20] sm:$0x1]
        %v544 = vld [vmem:[%s1 + $0x28] sm:$0x1]
        %v545 = vld [vmem:[%s1 + $0x30] sm:$0x1]
        %v546 = vld [vmem:[%s1 + $0x38] sm:$0x1]
        %v547 = vld [vmem:[%s489] sm:$0xff]
        %v548 = vld [vmem:[%s489 + $0x8] sm:$0xff]
        %v549 = vld [vmem:[%s489 + $0x10] sm:$0xff]
        %v550 = vld [vmem:[%s489 + $0x18] sm:$0xff]
        %v551 = vld [vmem:[%s2] sm:$0xf]
        %v552 = vpack.c.bf16 %v547, %v547
        %v553 = vpack.c.bf16 %v548, %v548
        %v554 = vpack.c.bf16 %v549, %v549
        %v555 = vpack.c.bf16 %v550, %v550
        %v556 = vld [vmem:[%s3] sm:$0xff]
        %558 = vset.pattern.permute.xlu0 0
        %559 = vperm.xlu0 %558, %v556
        %v560 = vpop.permute.xlu0 %559
        %vm562 = vcmask 64512
        %v564 = vsel %vm562, %v551, 0
        %vm566 = vcmask 1043456
        %v568 = vsel %vm566, %v552, 0
        %v571 = vsel %vm566, %v553, 0
        %v574 = vsel %vm566, %v554, 0
        %v577 = vsel %vm566, %v555, 0
        %579 = vmatprep.subr.bf16.mxu0 %v571
        %580 = vmatpush1.bf16.msra.mxu0 %v568
        %581 = vmatprep.subr.bf16.mxu0 0
        %582 = vmatpush1.bf16.msra.mxu0 0
        %583 = vmatprep.subr.bf16.mxu0 0
        %584 = vmatpush1.bf16.msra.mxu0 0
        %585 = vmatprep.subr.bf16.mxu0 0
        %586 = vmatpush1.bf16.msra.mxu0 0
        %587 = vmatprep.subr.bf16.mxu0 0
        %588 = vmatpush1.bf16.msra.mxu0 0
        %589 = vmatprep.subr.bf16.mxu0 0
        %590 = vmatpush1.bf16.msra.mxu0 0
        %591 = vmatprep.subr.bf16.mxu0 0
        %592 = vmatpush1.bf16.msra.mxu0 0
        %593 = vmatprep.subr.bf16.mxu0 0
        %594 = vmatpush1.bf16.msra.mxu0 0
        %595 = vmatprep.subr.bf16.mxu0 0
        %596 = vmatpush1.bf16.msra.mxu0 0
        %597 = vmatprep.subr.bf16.mxu0 0
        %598 = vmatpush1.bf16.msra.mxu0 0
        %599 = vmatprep.subr.bf16.mxu0 0
        %600 = vmatpush1.bf16.msra.mxu0 0
        %601 = vmatprep.subr.bf16.mxu0 0
        %602 = vmatpush1.bf16.msra.mxu0 0
        %603 = vmatprep.subr.bf16.mxu0 0
        %604 = vmatpush1.bf16.msra.mxu0 0
        %605 = vmatprep.subr.bf16.mxu0 0
        %606 = vmatpush1.bf16.msra.mxu0 0
        %607 = vmatprep.subr.bf16.mxu0 0
        %608 = vmatpush1.bf16.msra.mxu0 0
        %609 = vmatprep.subr.bf16.mxu0 0
        %610 = vmatpush1.bf16.msra.mxu0 0
        %611 = vmatprep.mubr.bf16.mxu0 0
        %612 = vmatmul.mubr.bf16.gmra.mrb[0].mxu0 %v564
        %v613 = vpop.f32.mrb[0].mxu0
        %v614 = vadd.f32 %v560, %v613
        %v615 = vpop.f32.mrb[0].mxu0
        %v616 = vadd.f32 %v560, %v615
        %v617 = vpop.f32.mrb[0].mxu0
        %v618 = vpop.f32.mrb[0].mxu0
        %619 = vdwg.mxu0
        %620 = vmatprep.subr.bf16.mxu0 %v577
        %621 = vmatpush1.bf16.msra.mxu0 %v574
        %622 = vmatprep.subr.bf16.mxu0 0
        %623 = vmatpush1.bf16.msra.mxu0 0
        %624 = vmatprep.subr.bf16.mxu0 0
        %625 = vmatpush1.bf16.msra.mxu0 0
        %626 = vmatprep.subr.bf16.mxu0 0
        %627 = vmatpush1.bf16.msra.mxu0 0
        %628 = vmatprep.subr.bf16.mxu0 0
        %629 = vmatpush1.bf16.msra.mxu0 0
        %630 = vmatprep.subr.bf16.mxu0 0
        %631 = vmatpush1.bf16.msra.mxu0 0
        %632 = vmatprep.subr.bf16.mxu0 0
        %633 = vmatpush1.bf16.msra.mxu0 0
        %634 = vmatprep.subr.bf16.mxu0 0
        %635 = vmatpush1.bf16.msra.mxu0 0
        %636 = vmatprep.subr.bf16.mxu0 0
        %637 = vmatpush1.bf16.msra.mxu0 0
        %638 = vmatprep.subr.bf16.mxu0 0
        %639 = vmatpush1.bf16.msra.mxu0 0
        %640 = vmatprep.subr.bf16.mxu0 0
        %641 = vmatpush1.bf16.msra.mxu0 0
        %642 = vmatprep.subr.bf16.mxu0 0
        %643 = vmatpush1.bf16.msra.mxu0 0
        %644 = vmatprep.subr.bf16.mxu0 0
        %645 = vmatpush1.bf16.msra.mxu0 0
        %646 = vmatprep.subr.bf16.mxu0 0
        %647 = vmatpush1.bf16.msra.mxu0 0
        %648 = vmatprep.subr.bf16.mxu0 0
        %649 = vmatpush1.bf16.msra.mxu0 0
        %650 = vmatprep.subr.bf16.mxu0 0
        %651 = vmatpush1.bf16.msra.mxu0 0
        %652 = vmatprep.mubr.bf16.mxu0 0
        %653 = vmatmul.mubr.bf16.gmra.mrb[0].mxu0 %v564
        %v654 = vpop.f32.mrb[0].mxu0
        %v655 = vadd.f32 %v560, %v654
        %v656 = vpop.f32.mrb[0].mxu0
        %v657 = vadd.f32 %v560, %v656
        %v658 = vpop.f32.mrb[0].mxu0
        %v659 = vpop.f32.mrb[0].mxu0
        %660 = vdwg.mxu0
        %v661 = vmax.f32 %v614, 0.0
        %v662 = vmax.f32 %v616, 0.0
        %v663 = vmax.f32 %v655, 0.0
        %v664 = vmax.f32 %v657, 0.0
        %665 = vrot.lane.b32.xlu0 %v661, 17
        %v666 = vpop.permute.xlu0 %665
        %667 = vrot.lane.b32.xlu0 %v662, 17
        %v668 = vpop.permute.xlu0 %667
        %669 = vrot.lane.b32.xlu0 %v663, 17
        %v670 = vpop.permute.xlu0 %669
        %671 = vrot.lane.b32.xlu0 %v664, 17
        %v672 = vpop.permute.xlu0 %671
        %v673 = vlaneseq
        %v674 = vand.u32 %v673, 127
        %vm675 = vcmp.lt.s32.totalorder %v674, 17
        %v676 = vsel %vm675, %v670, %v672
        %v677 = vsel %vm675, %v668, %v670
        %v678 = vsel %vm675, %v666, %v668
        %v679 = vsel %vm675, %v672, %v666
        %v680 = vlaneseq
        %v681 = vshrl.u32 %v680, 7
        %v682 = vsub.s32 0, %v681
        %v683 = vrot.slane %v539, %v682
        %v684 = vlaneseq
        %v685 = vshrl.u32 %v684, 7
        %v686 = vsub.s32 0, %v685
        %v687 = vrot.slane %v540, %v686
        %v688 = vlaneseq
        %v689 = vshrl.u32 %v688, 7
        %v690 = vsub.s32 0, %v689
        %v691 = vrot.slane %v541, %v690
        %v692 = vlaneseq
        %v693 = vshrl.u32 %v692, 7
        %v694 = vsub.s32 0, %v693
        %v695 = vrot.slane %v542, %v694
        %v696 = vmul.f32 %v679, %v683
        %v697 = vmul.f32 %v678, %v687
        %v698 = vmul.f32 %v677, %v691
        %v699 = vmul.f32 %v676, %v695
        %700 = vrot.lane.b32.xlu0 %v661, 16
        %v701 = vpop.permute.xlu0 %700
        %702 = vrot.lane.b32.xlu0 %v662, 16
        %v703 = vpop.permute.xlu0 %702
        %704 = vrot.lane.b32.xlu0 %v663, 16
        %v705 = vpop.permute.xlu0 %704
        %706 = vrot.lane.b32.xlu0 %v664, 16
        %v707 = vpop.permute.xlu0 %706
        %vm708 = vcmp.lt.s32.totalorder %v674, 16
        %v709 = vsel %vm708, %v705, %v707
        %v710 = vsel %vm708, %v703, %v705
        %v711 = vsel %vm708, %v701, %v703
        %v712 = vsel %vm708, %v707, %v701
        %v713 = vlaneseq
        %v714 = vshrl.u32 %v713, 7
        %v715 = vsub.s32 1, %v714
        %v716 = vrot.slane %v539, %v715
        %v717 = vlaneseq
        %v718 = vshrl.u32 %v717, 7
        %v719 = vsub.s32 1, %v718
        %v720 = vrot.slane %v540, %v719
        %v721 = vlaneseq
        %v722 = vshrl.u32 %v721, 7
        %v723 = vsub.s32 1, %v722
        %v724 = vrot.slane %v541, %v723
        %v725 = vlaneseq
        %v726 = vshrl.u32 %v725, 7
        %v727 = vsub.s32 1, %v726
        %v728 = vrot.slane %v542, %v727
        %v729 = vmul.f32 %v712, %v716
        %v730 = vmul.f32 %v711, %v720
        %v731 = vmul.f32 %v710, %v724
        %v732 = vmul.f32 %v709, %v728
        %733 = vrot.lane.b32.xlu0 %v661, 15
        %v734 = vpop.permute.xlu0 %733
        %735 = vrot.lane.b32.xlu0 %v662, 15
        %v736 = vpop.permute.xlu0 %735
        %737 = vrot.lane.b32.xlu0 %v663, 15
        %v738 = vpop.permute.xlu0 %737
        %739 = vrot.lane.b32.xlu0 %v664, 15
        %v740 = vpop.permute.xlu0 %739
        %vm741 = vcmp.lt.s32.totalorder %v674, 15
        %v742 = vsel %vm741, %v738, %v740
        %v743 = vsel %vm741, %v736, %v738
        %v744 = vsel %vm741, %v734, %v736
        %v745 = vsel %vm741, %v740, %v734
        %v746 = vlaneseq
        %v747 = vshrl.u32 %v746, 7
        %v748 = vsub.s32 2, %v747
        %v749 = vrot.slane %v539, %v748
        %v750 = vlaneseq
        %v751 = vshrl.u32 %v750, 7
        %v752 = vsub.s32 2, %v751
        %v753 = vrot.slane %v540, %v752
        %v754 = vlaneseq
        %v755 = vshrl.u32 %v754, 7
        %v756 = vsub.s32 2, %v755
        %v757 = vrot.slane %v541, %v756
        %v758 = vlaneseq
        %v759 = vshrl.u32 %v758, 7
        %v760 = vsub.s32 2, %v759
        %v761 = vrot.slane %v542, %v760
        %v762 = vmul.f32 %v745, %v749
        %v763 = vmul.f32 %v744, %v753
        %v764 = vmul.f32 %v743, %v757
        %v765 = vmul.f32 %v742, %v761
        %766 = vrot.lane.b32.xlu0 %v661, 1
        %v767 = vpop.permute.xlu0 %766
        %768 = vrot.lane.b32.xlu0 %v662, 1
        %v769 = vpop.permute.xlu0 %768
        %770 = vrot.lane.b32.xlu0 %v663, 1
        %v771 = vpop.permute.xlu0 %770
        %772 = vrot.lane.b32.xlu0 %v664, 1
        %v773 = vpop.permute.xlu0 %772
        %vm774 = vcmp.lt.s32.totalorder %v674, 1
        %v775 = vsel %vm774, %v771, %v773
        %v776 = vsel %vm774, %v769, %v771
        %v777 = vsel %vm774, %v767, %v769
        %v778 = vsel %vm774, %v773, %v767
        %v779 = vlaneseq
        %v780 = vshrl.u32 %v779, 7
        %v781 = vsub.s32 3, %v780
        %v782 = vrot.slane %v539, %v781
        %v783 = vlaneseq
        %v784 = vshrl.u32 %v783, 7
        %v785 = vsub.s32 3, %v784
        %v786 = vrot.slane %v540, %v785
        %v787 = vlaneseq
        %v788 = vshrl.u32 %v787, 7
        %v789 = vsub.s32 3, %v788
        %v790 = vrot.slane %v541, %v789
        %v791 = vlaneseq
        %v792 = vshrl.u32 %v791, 7
        %v793 = vsub.s32 3, %v792
        %v794 = vrot.slane %v542, %v793
        %v795 = vmul.f32 %v778, %v782
        %v796 = vmul.f32 %v777, %v786
        %v797 = vmul.f32 %v776, %v790
        %v798 = vmul.f32 %v775, %v794
        %799 = vrot.lane.b32.xlu0 %v661, 127
        %v800 = vpop.permute.xlu0 %799
        %801 = vrot.lane.b32.xlu0 %v662, 127
        %v802 = vpop.permute.xlu0 %801
        %803 = vrot.lane.b32.xlu0 %v663, 127
        %v804 = vpop.permute.xlu0 %803
        %805 = vrot.lane.b32.xlu0 %v664, 127
        %v806 = vpop.permute.xlu0 %805
        %vm807 = vcmp.lt.s32.totalorder %v674, 127
        %v808 = vsel %vm807, %v804, %v806
        %v809 = vsel %vm807, %v802, %v804
        %v810 = vsel %vm807, %v800, %v802
        %v811 = vsel %vm807, %v806, %v800
        %v812 = vlaneseq
        %v813 = vshrl.u32 %v812, 7
        %v814 = vsub.s32 5, %v813
        %v815 = vrot.slane %v539, %v814
        %v816 = vlaneseq
        %v817 = vshrl.u32 %v816, 7
        %v818 = vsub.s32 5, %v817
        %v819 = vrot.slane %v540, %v818
        %v820 = vlaneseq
        %v821 = vshrl.u32 %v820, 7
        %v822 = vsub.s32 5, %v821
        %v823 = vrot.slane %v541, %v822
        %v824 = vlaneseq
        %v825 = vshrl.u32 %v824, 7
        %v826 = vsub.s32 5, %v825
        %v827 = vrot.slane %v542, %v826
        %v828 = vmul.f32 %v810, %v815
        %v829 = vmul.f32 %v809, %v819
        %v830 = vmul.f32 %v808, %v823
        %v831 = vmul.f32 %v811, %v827
        %832 = vrot.lane.b32.xlu0 %v661, 113
        %v833 = vpop.permute.xlu0 %832
        %834 = vrot.lane.b32.xlu0 %v662, 113
        %v835 = vpop.permute.xlu0 %834
        %836 = vrot.lane.b32.xlu0 %v663, 113
        %v837 = vpop.permute.xlu0 %836
        %838 = vrot.lane.b32.xlu0 %v664, 113
        %v839 = vpop.permute.xlu0 %838
        %vm840 = vcmp.lt.s32.totalorder %v674, 113
        %v841 = vsel %vm840, %v837, %v839
        %v842 = vsel %vm840, %v835, %v837
        %v843 = vsel %vm840, %v833, %v835
        %v844 = vsel %vm840, %v839, %v833
        %v845 = vlaneseq
        %v846 = vshrl.u32 %v845, 7
        %v847 = vsub.s32 6, %v846
        %v848 = vrot.slane %v539, %v847
        %v849 = vlaneseq
        %v850 = vshrl.u32 %v849, 7
        %v851 = vsub.s32 6, %v850
        %v852 = vrot.slane %v540, %v851
        %v853 = vlaneseq
        %v854 = vshrl.u32 %v853, 7
        %v855 = vsub.s32 6, %v854
        %v856 = vrot.slane %v541, %v855
        %v857 = vlaneseq
        %v858 = vshrl.u32 %v857, 7
        %v859 = vsub.s32 6, %v858
        %v860 = vrot.slane %v542, %v859
        %v861 = vmul.f32 %v843, %v848
        %v862 = vmul.f32 %v842, %v852
        %v863 = vmul.f32 %v841, %v856
        %v864 = vmul.f32 %v844, %v860
        %865 = vrot.lane.b32.xlu0 %v661, 112
        %v866 = vpop.permute.xlu0 %865
        %867 = vrot.lane.b32.xlu0 %v662, 112
        %v868 = vpop.permute.xlu0 %867
        %869 = vrot.lane.b32.xlu0 %v663, 112
        %v870 = vpop.permute.xlu0 %869
        %871 = vrot.lane.b32.xlu0 %v664, 112
        %v872 = vpop.permute.xlu0 %871
        %vm873 = vcmp.lt.s32.totalorder %v674, 112
        %v874 = vsel %vm873, %v870, %v872
        %v875 = vsel %vm873, %v868, %v870
        %v876 = vsel %vm873, %v866, %v868
        %v877 = vsel %vm873, %v872, %v866
        %v878 = vlaneseq
        %v879 = vshrl.u32 %v878, 7
        %v880 = vsub.s32 7, %v879
        %v881 = vrot.slane %v539, %v880
        %v882 = vlaneseq
        %v883 = vshrl.u32 %v882, 7
        %v884 = vsub.s32 7, %v883
        %v885 = vrot.slane %v540, %v884
        %v886 = vlaneseq
        %v887 = vshrl.u32 %v886, 7
        %v888 = vsub.s32 7, %v887
        %v889 = vrot.slane %v541, %v888
        %v890 = vlaneseq
        %v891 = vshrl.u32 %v890, 7
        %v892 = vsub.s32 7, %v891
        %v893 = vrot.slane %v542, %v892
        %v894 = vmul.f32 %v876, %v881
        %v895 = vmul.f32 %v875, %v885
        %v896 = vmul.f32 %v874, %v889
        %v897 = vmul.f32 %v877, %v893
        %898 = vrot.lane.b32.xlu0 %v661, 111
        %v899 = vpop.permute.xlu0 %898
        %900 = vrot.lane.b32.xlu0 %v662, 111
        %v901 = vpop.permute.xlu0 %900
        %902 = vrot.lane.b32.xlu0 %v663, 111
        %v903 = vpop.permute.xlu0 %902
        %904 = vrot.lane.b32.xlu0 %v664, 111
        %v905 = vpop.permute.xlu0 %904
        %vm906 = vcmp.lt.s32.totalorder %v674, 111
        %v907 = vsel %vm906, %v903, %v905
        %v908 = vsel %vm906, %v901, %v903
        %v909 = vsel %vm906, %v899, %v901
        %v910 = vsel %vm906, %v905, %v899
        %v911 = vlaneseq
        %v912 = vshrl.u32 %v911, 7
        %v913 = vsub.s32 0, %v912
        %v914 = vrot.slane %v543, %v913
        %v915 = vlaneseq
        %v916 = vshrl.u32 %v915, 7
        %v917 = vsub.s32 0, %v916
        %v918 = vrot.slane %v544, %v917
        %v919 = vlaneseq
        %v920 = vshrl.u32 %v919, 7
        %v921 = vsub.s32 0, %v920
        %v922 = vrot.slane %v545, %v921
        %v923 = vlaneseq
        %v924 = vshrl.u32 %v923, 7
        %v925 = vsub.s32 0, %v924
        %v926 = vrot.slane %v546, %v925
        %v927 = vmul.f32 %v909, %v914
        %v928 = vmul.f32 %v908, %v918
        %v929 = vmul.f32 %v907, %v922
        %v930 = vmul.f32 %v910, %v926
        %v931 = vld [vmem:[%s4] sm:$0xf]
        %v932 = vpack.c.bf16 %v729, %v696
        %v933 = vpack.c.bf16 %v730, %v697
        %v934 = vpack.c.bf16 %v731, %v698
        %v935 = vpack.c.bf16 %v732, %v699
        %v936 = vpack.c.bf16 %v795, %v762
        %v937 = vpack.c.bf16 %v796, %v763
        %v938 = vpack.c.bf16 %v797, %v764
        %v939 = vpack.c.bf16 %v798, %v765
        %v940 = vpack.c.bf16 %v828, %v661
        %v941 = vpack.c.bf16 %v829, %v662
        %v942 = vpack.c.bf16 %v830, %v663
        %v943 = vpack.c.bf16 %v831, %v664
        %v944 = vpack.c.bf16 %v894, %v861
        %v945 = vpack.c.bf16 %v895, %v862
        %v946 = vpack.c.bf16 %v896, %v863
        %v947 = vpack.c.bf16 %v897, %v864
        %v948 = vpack.c.bf16 %v927, %v927
        %v949 = vpack.c.bf16 %v928, %v928
        %v950 = vpack.c.bf16 %v929, %v929
        %v951 = vpack.c.bf16 %v930, %v930
        %v952 = vld [vmem:[%s5] sm:$0xff]
        %954 = vset.pattern.permute.xlu0 0
        %955 = vperm.xlu0 %954, %v952
        %v956 = vpop.permute.xlu0 %955
        %vm958 = vcmask 588800
        %v960 = vsel %vm958, %v931, 0
        %v963 = vsel %vm566, %v948, 0
        %v966 = vsel %vm566, %v949, 0
        %v969 = vsel %vm566, %v950, 0
        %v972 = vsel %vm566, %v951, 0
        %974 = vmatprep.subr.bf16.mxu0 %v933
        %975 = vmatpush1.bf16.msra.mxu0 %v932
        %976 = vmatprep.subr.bf16.mxu0 %v937
        %977 = vmatpush1.bf16.msra.mxu0 %v936
        %978 = vmatprep.subr.bf16.mxu0 %v941
        %979 = vmatpush1.bf16.msra.mxu0 %v940
        %980 = vmatprep.subr.bf16.mxu0 %v945
        %981 = vmatpush1.bf16.msra.mxu0 %v944
        %982 = vmatprep.subr.bf16.mxu0 %v966
        %983 = vmatpush1.bf16.msra.mxu0 %v963
        %984 = vmatprep.subr.bf16.mxu0 0
        %985 = vmatpush1.bf16.msra.mxu0 0
        %986 = vmatprep.subr.bf16.mxu0 0
        %987 = vmatpush1.bf16.msra.mxu0 0
        %988 = vmatprep.subr.bf16.mxu0 0
        %989 = vmatpush1.bf16.msra.mxu0 0
        %990 = vmatprep.subr.bf16.mxu0 0
        %991 = vmatpush1.bf16.msra.mxu0 0
        %992 = vmatprep.subr.bf16.mxu0 0
        %993 = vmatpush1.bf16.msra.mxu0 0
        %994 = vmatprep.subr.bf16.mxu0 0
        %995 = vmatpush1.bf16.msra.mxu0 0
        %996 = vmatprep.subr.bf16.mxu0 0
        %997 = vmatpush1.bf16.msra.mxu0 0
        %998 = vmatprep.subr.bf16.mxu0 0
        %999 = vmatpush1.bf16.msra.mxu0 0
        %1000 = vmatprep.subr.bf16.mxu0 0
        %1001 = vmatpush1.bf16.msra.mxu0 0
        %1002 = vmatprep.subr.bf16.mxu0 0
        %1003 = vmatpush1.bf16.msra.mxu0 0
        %1004 = vmatprep.subr.bf16.mxu0 0
        %1005 = vmatpush1.bf16.msra.mxu0 0
        %1006 = vmatprep.mubr.bf16.mxu0 0
        %1007 = vmatmul.mubr.bf16.gmra.mrb[0].mxu0 %v960
        %v1008 = vpop.f32.mrb[0].mxu0
        %v1009 = vadd.f32 %v956, %v1008
        %v1010 = vpop.f32.mrb[0].mxu0
        %v1011 = vadd.f32 %v956, %v1010
        %v1012 = vpop.f32.mrb[0].mxu0
        %v1013 = vpop.f32.mrb[0].mxu0
        %1014 = vdwg.mxu0
        %1015 = vmatprep.subr.bf16.mxu0 %v935
        %1016 = vmatpush1.bf16.msra.mxu0 %v934
        %1017 = vmatprep.subr.bf16.mxu0 %v939
        %1018 = vmatpush1.bf16.msra.mxu0 %v938
        %1019 = vmatprep.subr.bf16.mxu0 %v943
        %1020 = vmatpush1.bf16.msra.mxu0 %v942
        %1021 = vmatprep.subr.bf16.mxu0 %v947
        %1022 = vmatpush1.bf16.msra.mxu0 %v946
        %1023 = vmatprep.subr.bf16.mxu0 %v972
        %1024 = vmatpush1.bf16.msra.mxu0 %v969
        %1025 = vmatprep.subr.bf16.mxu0 0
        %1026 = vmatpush1.bf16.msra.mxu0 0
        %1027 = vmatprep.subr.bf16.mxu0 0
        %1028 = vmatpush1.bf16.msra.mxu0 0
        %1029 = vmatprep.subr.bf16.mxu0 0
        %1030 = vmatpush1.bf16.msra.mxu0 0
        %1031 = vmatprep.subr.bf16.mxu0 0
        %1032 = vmatpush1.bf16.msra.mxu0 0
        %1033 = vmatprep.subr.bf16.mxu0 0
        %1034 = vmatpush1.bf16.msra.mxu0 0
        %1035 = vmatprep.subr.bf16.mxu0 0
        %1036 = vmatpush1.bf16.msra.mxu0 0
        %1037 = vmatprep.subr.bf16.mxu0 0
        %1038 = vmatpush1.bf16.msra.mxu0 0
        %1039 = vmatprep.subr.bf16.mxu0 0
        %1040 = vmatpush1.bf16.msra.mxu0 0
        %1041 = vmatprep.subr.bf16.mxu0 0
        %1042 = vmatpush1.bf16.msra.mxu0 0
        %1043 = vmatprep.subr.bf16.mxu0 0
        %1044 = vmatpush1.bf16.msra.mxu0 0
        %1045 = vmatprep.subr.bf16.mxu0 0
        %1046 = vmatpush1.bf16.msra.mxu0 0
        %1047 = vmatprep.mubr.bf16.mxu0 0
        %1048 = vmatmul.mubr.bf16.gmra.mrb[0].mxu0 %v960
        %v1049 = vpop.f32.mrb[0].mxu0
        %v1050 = vadd.f32 %v956, %v1049
        %v1051 = vpop.f32.mrb[0].mxu0
        %v1052 = vadd.f32 %v956, %v1051
        %v1053 = vpop.f32.mrb[0].mxu0
        %v1054 = vpop.f32.mrb[0].mxu0
        %1055 = vdwg.mxu0
        %v1056 = vmax.f32 %v1009, 0.0
        %v1057 = vmax.f32 %v1011, 0.0
        %v1058 = vmax.f32 %v1050, 0.0
        %v1059 = vmax.f32 %v1052, 0.0
        %1060 = vrot.lane.b32.xlu0 %v1056, 17
        %v1061 = vpop.permute.xlu0 %1060
        %1062 = vrot.lane.b32.xlu0 %v1057, 17
        %v1063 = vpop.permute.xlu0 %1062
        %1064 = vrot.lane.b32.xlu0 %v1058, 17
        %v1065 = vpop.permute.xlu0 %1064
        %1066 = vrot.lane.b32.xlu0 %v1059, 17
        %v1067 = vpop.permute.xlu0 %1066
        %v1068 = vsel %vm675, %v1065, %v1067
        %v1069 = vsel %vm675, %v1063, %v1065
        %v1070 = vsel %vm675, %v1061, %v1063
        %v1071 = vsel %vm675, %v1067, %v1061
        %v1072 = vmul.f32 %v1071, %v683
        %v1073 = vmul.f32 %v1070, %v687
        %v1074 = vmul.f32 %v1069, %v691
        %v1075 = vmul.f32 %v1068, %v695
        %1076 = vrot.lane.b32.xlu0 %v1056, 16
        %v1077 = vpop.permute.xlu0 %1076
        %1078 = vrot.lane.b32.xlu0 %v1057, 16
        %v1079 = vpop.permute.xlu0 %1078
        %1080 = vrot.lane.b32.xlu0 %v1058, 16
        %v1081 = vpop.permute.xlu0 %1080
        %1082 = vrot.lane.b32.xlu0 %v1059, 16
        %v1083 = vpop.permute.xlu0 %1082
        %v1084 = vsel %vm708, %v1081, %v1083
        %v1085 = vsel %vm708, %v1079, %v1081
        %v1086 = vsel %vm708, %v1077, %v1079
        %v1087 = vsel %vm708, %v1083, %v1077
        %v1088 = vmul.f32 %v1087, %v716
        %v1089 = vmul.f32 %v1086, %v720
        %v1090 = vmul.f32 %v1085, %v724
        %v1091 = vmul.f32 %v1084, %v728
        %1092 = vrot.lane.b32.xlu0 %v1056, 15
        %v1093 = vpop.permute.xlu0 %1092
        %1094 = vrot.lane.b32.xlu0 %v1057, 15
        %v1095 = vpop.permute.xlu0 %1094
        %1096 = vrot.lane.b32.xlu0 %v1058, 15
        %v1097 = vpop.permute.xlu0 %1096
        %1098 = vrot.lane.b32.xlu0 %v1059, 15
        %v1099 = vpop.permute.xlu0 %1098
        %v1100 = vsel %vm741, %v1097, %v1099
        %v1101 = vsel %vm741, %v1095, %v1097
        %v1102 = vsel %vm741, %v1093, %v1095
        %v1103 = vsel %vm741, %v1099, %v1093
        %v1104 = vmul.f32 %v1103, %v749
        %v1105 = vmul.f32 %v1102, %v753
        %v1106 = vmul.f32 %v1101, %v757
        %v1107 = vmul.f32 %v1100, %v761
        %1108 = vrot.lane.b32.xlu0 %v1056, 1
        %v1109 = vpop.permute.xlu0 %1108
        %1110 = vrot.lane.b32.xlu0 %v1057, 1
        %v1111 = vpop.permute.xlu0 %1110
        %1112 = vrot.lane.b32.xlu0 %v1058, 1
        %v1113 = vpop.permute.xlu0 %1112
        %1114 = vrot.lane.b32.xlu0 %v1059, 1
        %v1115 = vpop.permute.xlu0 %1114
        %v1116 = vsel %vm774, %v1113, %v1115
        %v1117 = vsel %vm774, %v1111, %v1113
        %v1118 = vsel %vm774, %v1109, %v1111
        %v1119 = vsel %vm774, %v1115, %v1109
        %v1120 = vmul.f32 %v1119, %v782
        %v1121 = vmul.f32 %v1118, %v786
        %v1122 = vmul.f32 %v1117, %v790
        %v1123 = vmul.f32 %v1116, %v794
        %1124 = vrot.lane.b32.xlu0 %v1056, 127
        %v1125 = vpop.permute.xlu0 %1124
        %1126 = vrot.lane.b32.xlu0 %v1057, 127
        %v1127 = vpop.permute.xlu0 %1126
        %1128 = vrot.lane.b32.xlu0 %v1058, 127
        %v1129 = vpop.permute.xlu0 %1128
        %1130 = vrot.lane.b32.xlu0 %v1059, 127
        %v1131 = vpop.permute.xlu0 %1130
        %v1132 = vsel %vm807, %v1129, %v1131
        %v1133 = vsel %vm807, %v1127, %v1129
        %v1134 = vsel %vm807, %v1125, %v1127
        %v1135 = vsel %vm807, %v1131, %v1125
        %v1136 = vmul.f32 %v1134, %v815
        %v1137 = vmul.f32 %v1133, %v819
        %v1138 = vmul.f32 %v1132, %v823
        %v1139 = vmul.f32 %v1135, %v827
        %1140 = vrot.lane.b32.xlu0 %v1056, 113
        %v1141 = vpop.permute.xlu0 %1140
        %1142 = vrot.lane.b32.xlu0 %v1057, 113
        %v1143 = vpop.permute.xlu0 %1142
        %1144 = vrot.lane.b32.xlu0 %v1058, 113
        %v1145 = vpop.permute.xlu0 %1144
        %1146 = vrot.lane.b32.xlu0 %v1059, 113
        %v1147 = vpop.permute.xlu0 %1146
        %v1148 = vsel %vm840, %v1145, %v1147
        %v1149 = vsel %vm840, %v1143, %v1145
        %v1150 = vsel %vm840, %v1141, %v1143
        %v1151 = vsel %vm840, %v1147, %v1141
        %v1152 = vmul.f32 %v1150, %v848
        %v1153 = vmul.f32 %v1149, %v852
        %v1154 = vmul.f32 %v1148, %v856
        %v1155 = vmul.f32 %v1151, %v860
        %1156 = vrot.lane.b32.xlu0 %v1056, 112
        %v1157 = vpop.permute.xlu0 %1156
        %1158 = vrot.lane.b32.xlu0 %v1057, 112
        %v1159 = vpop.permute.xlu0 %1158
        %1160 = vrot.lane.b32.xlu0 %v1058, 112
        %v1161 = vpop.permute.xlu0 %1160
        %1162 = vrot.lane.b32.xlu0 %v1059, 112
        %v1163 = vpop.permute.xlu0 %1162
        %v1164 = vsel %vm873, %v1161, %v1163
        %v1165 = vsel %vm873, %v1159, %v1161
        %v1166 = vsel %vm873, %v1157, %v1159
        %v1167 = vsel %vm873, %v1163, %v1157
        %v1168 = vmul.f32 %v1166, %v881
        %v1169 = vmul.f32 %v1165, %v885
        %v1170 = vmul.f32 %v1164, %v889
        %v1171 = vmul.f32 %v1167, %v893
        %1172 = vrot.lane.b32.xlu0 %v1056, 111
        %v1173 = vpop.permute.xlu0 %1172
        %1174 = vrot.lane.b32.xlu0 %v1057, 111
        %v1175 = vpop.permute.xlu0 %1174
        %1176 = vrot.lane.b32.xlu0 %v1058, 111
        %v1177 = vpop.permute.xlu0 %1176
        %1178 = vrot.lane.b32.xlu0 %v1059, 111
        %v1179 = vpop.permute.xlu0 %1178
        %v1180 = vsel %vm906, %v1177, %v1179
        %v1181 = vsel %vm906, %v1175, %v1177
        %v1182 = vsel %vm906, %v1173, %v1175
        %v1183 = vsel %vm906, %v1179, %v1173
        %v1184 = vmul.f32 %v1182, %v914
        %v1185 = vmul.f32 %v1181, %v918
        %v1186 = vmul.f32 %v1180, %v922
        %v1187 = vmul.f32 %v1183, %v926
        %v1188 = vld [vmem:[%s6] sm:$0xf]
        %v1189 = vpack.c.bf16 %v1088, %v1072
        %v1190 = vpack.c.bf16 %v1089, %v1073
        %v1191 = vpack.c.bf16 %v1090, %v1074
        %v1192 = vpack.c.bf16 %v1091, %v1075
        %v1193 = vpack.c.bf16 %v1120, %v1104
        %v1194 = vpack.c.bf16 %v1121, %v1105
        %v1195 = vpack.c.bf16 %v1122, %v1106
        %v1196 = vpack.c.bf16 %v1123, %v1107
        %v1197 = vpack.c.bf16 %v1136, %v1056
        %v1198 = vpack.c.bf16 %v1137, %v1057
        %v1199 = vpack.c.bf16 %v1138, %v1058
        %v1200 = vpack.c.bf16 %v1139, %v1059
        %v1201 = vpack.c.bf16 %v1168, %v1152
        %v1202 = vpack.c.bf16 %v1169, %v1153
        %v1203 = vpack.c.bf16 %v1170, %v1154
        %v1204 = vpack.c.bf16 %v1171, %v1155
        %v1205 = vpack.c.bf16 %v1184, %v1184
        %v1206 = vpack.c.bf16 %v1185, %v1185
        %v1207 = vpack.c.bf16 %v1186, %v1186
        %v1208 = vpack.c.bf16 %v1187, %v1187
        %v1209 = vld [vmem:[%s7] sm:$0xff]
        %1211 = vset.pattern.permute.xlu0 0
        %1212 = vperm.xlu0 %1211, %v1209
        %v1213 = vpop.permute.xlu0 %1212
        %v1216 = vsel %vm958, %v1188, 0
        %v1219 = vsel %vm566, %v1205, 0
        %v1222 = vsel %vm566, %v1206, 0
        %v1225 = vsel %vm566, %v1207, 0
        %v1228 = vsel %vm566, %v1208, 0
        %1230 = vmatprep.subr.bf16.mxu0 %v1190
        %1231 = vmatpush1.bf16.msra.mxu0 %v1189
        %1232 = vmatprep.subr.bf16.mxu0 %v1194
        %1233 = vmatpush1.bf16.msra.mxu0 %v1193
        %1234 = vmatprep.subr.bf16.mxu0 %v1198
        %1235 = vmatpush1.bf16.msra.mxu0 %v1197
        %1236 = vmatprep.subr.bf16.mxu0 %v1202
        %1237 = vmatpush1.bf16.msra.mxu0 %v1201
        %1238 = vmatprep.subr.bf16.mxu0 %v1222
        %1239 = vmatpush1.bf16.msra.mxu0 %v1219
        %1240 = vmatprep.subr.bf16.mxu0 0
        %1241 = vmatpush1.bf16.msra.mxu0 0
        %1242 = vmatprep.subr.bf16.mxu0 0
        %1243 = vmatpush1.bf16.msra.mxu0 0
        %1244 = vmatprep.subr.bf16.mxu0 0
        %1245 = vmatpush1.bf16.msra.mxu0 0
        %1246 = vmatprep.subr.bf16.mxu0 0
        %1247 = vmatpush1.bf16.msra.mxu0 0
        %1248 = vmatprep.subr.bf16.mxu0 0
        %1249 = vmatpush1.bf16.msra.mxu0 0
        %1250 = vmatprep.subr.bf16.mxu0 0
        %1251 = vmatpush1.bf16.msra.mxu0 0
        %1252 = vmatprep.subr.bf16.mxu0 0
        %1253 = vmatpush1.bf16.msra.mxu0 0
        %1254 = vmatprep.subr.bf16.mxu0 0
        %1255 = vmatpush1.bf16.msra.mxu0 0
        %1256 = vmatprep.subr.bf16.mxu0 0
        %1257 = vmatpush1.bf16.msra.mxu0 0
        %1258 = vmatprep.subr.bf16.mxu0 0
        %1259 = vmatpush1.bf16.msra.mxu0 0
        %1260 = vmatprep.subr.bf16.mxu0 0
        %1261 = vmatpush1.bf16.msra.mxu0 0
        %1262 = vmatprep.mubr.bf16.mxu0 0
        %1263 = vmatmul.mubr.bf16.gmra.mrb[0].mxu0 %v1216
        %v1264 = vpop.f32.mrb[0].mxu0
        %v1265 = vadd.f32 %v1213, %v1264
        %v1266 = vpop.f32.mrb[0].mxu0
        %v1267 = vadd.f32 %v1213, %v1266
        %v1268 = vpop.f32.mrb[0].mxu0
        %v1269 = vpop.f32.mrb[0].mxu0
        %1270 = vdwg.mxu0
        %1271 = vmatprep.subr.bf16.mxu0 %v1192
        %1272 = vmatpush1.bf16.msra.mxu0 %v1191
        %1273 = vmatprep.subr.bf16.mxu0 %v1196
        %1274 = vmatpush1.bf16.msra.mxu0 %v1195
        %1275 = vmatprep.subr.bf16.mxu0 %v1200
        %1276 = vmatpush1.bf16.msra.mxu0 %v1199
        %1277 = vmatprep.subr.bf16.mxu0 %v1204
        %1278 = vmatpush1.bf16.msra.mxu0 %v1203
        %1279 = vmatprep.subr.bf16.mxu0 %v1228
        %1280 = vmatpush1.bf16.msra.mxu0 %v1225
        %1281 = vmatprep.subr.bf16.mxu0 0
        %1282 = vmatpush1.bf16.msra.mxu0 0
        %1283 = vmatprep.subr.bf16.mxu0 0
        %1284 = vmatpush1.bf16.msra.mxu0 0
        %1285 = vmatprep.subr.bf16.mxu0 0
        %1286 = vmatpush1.bf16.msra.mxu0 0
        %1287 = vmatprep.subr.bf16.mxu0 0
        %1288 = vmatpush1.bf16.msra.mxu0 0
        %1289 = vmatprep.subr.bf16.mxu0 0
        %1290 = vmatpush1.bf16.msra.mxu0 0
        %1291 = vmatprep.subr.bf16.mxu0 0
        %1292 = vmatpush1.bf16.msra.mxu0 0
        %1293 = vmatprep.subr.bf16.mxu0 0
        %1294 = vmatpush1.bf16.msra.mxu0 0
        %1295 = vmatprep.subr.bf16.mxu0 0
        %1296 = vmatpush1.bf16.msra.mxu0 0
        %1297 = vmatprep.subr.bf16.mxu0 0
        %1298 = vmatpush1.bf16.msra.mxu0 0
        %1299 = vmatprep.subr.bf16.mxu0 0
        %1300 = vmatpush1.bf16.msra.mxu0 0
        %1301 = vmatprep.subr.bf16.mxu0 0
        %1302 = vmatpush1.bf16.msra.mxu0 0
        %1303 = vmatprep.mubr.bf16.mxu0 0
        %1304 = vmatmul.mubr.bf16.gmra.mrb[0].mxu0 %v1216
        %v1305 = vpop.f32.mrb[0].mxu0
        %v1306 = vadd.f32 %v1213, %v1305
        %v1307 = vpop.f32.mrb[0].mxu0
        %v1308 = vadd.f32 %v1213, %v1307
        %v1309 = vpop.f32.mrb[0].mxu0
        %v1310 = vpop.f32.mrb[0].mxu0
        %1311 = vdwg.mxu0
        %v1312 = vmax.f32 %v1265, 0.0
        %v1313 = vmax.f32 %v1267, 0.0
        %v1314 = vmax.f32 %v1306, 0.0
        %v1315 = vmax.f32 %v1308, 0.0
        %v1316 = vadd.f32 %v1056, %v1312
        %v1317 = vadd.f32 %v1057, %v1313
        %v1318 = vadd.f32 %v1058, %v1314
        %v1319 = vadd.f32 %v1059, %v1315
        %1320 = vrot.lane.b32.xlu0 %v1316, 17
        %v1321 = vpop.permute.xlu0 %1320
        %1322 = vrot.lane.b32.xlu0 %v1317, 17
        %v1323 = vpop.permute.xlu0 %1322
        %1324 = vrot.lane.b32.xlu0 %v1318, 17
        %v1325 = vpop.permute.xlu0 %1324
        %1326 = vrot.lane.b32.xlu0 %v1319, 17
        %v1327 = vpop.permute.xlu0 %1326
        %v1328 = vsel %vm675, %v1325, %v1327
        %v1329 = vsel %vm675, %v1323, %v1325
        %v1330 = vsel %vm675, %v1321, %v1323
        %v1331 = vsel %vm675, %v1327, %v1321
        %v1332 = vmul.f32 %v1331, %v683
        %v1333 = vmul.f32 %v1330, %v687
        %v1334 = vmul.f32 %v1329, %v691
        %v1335 = vmul.f32 %v1328, %v695
        %1336 = vrot.lane.b32.xlu0 %v1316, 16
        %v1337 = vpop.permute.xlu0 %1336
        %1338 = vrot.lane.b32.xlu0 %v1317, 16
        %v1339 = vpop.permute.xlu0 %1338
        %1340 = vrot.lane.b32.xlu0 %v1318, 16
        %v1341 = vpop.permute.xlu0 %1340
        %1342 = vrot.lane.b32.xlu0 %v1319, 16
        %v1343 = vpop.permute.xlu0 %1342
        %v1344 = vsel %vm708, %v1341, %v1343
        %v1345 = vsel %vm708, %v1339, %v1341
        %v1346 = vsel %vm708, %v1337, %v1339
        %v1347 = vsel %vm708, %v1343, %v1337
        %v1348 = vmul.f32 %v1347, %v716
        %v1349 = vmul.f32 %v1346, %v720
        %v1350 = vmul.f32 %v1345, %v724
        %v1351 = vmul.f32 %v1344, %v728
        %1352 = vrot.lane.b32.xlu0 %v1316, 15
        %v1353 = vpop.permute.xlu0 %1352
        %1354 = vrot.lane.b32.xlu0 %v1317, 15
        %v1355 = vpop.permute.xlu0 %1354
        %1356 = vrot.lane.b32.xlu0 %v1318, 15
        %v1357 = vpop.permute.xlu0 %1356
        %1358 = vrot.lane.b32.xlu0 %v1319, 15
        %v1359 = vpop.permute.xlu0 %1358
        %v1360 = vsel %vm741, %v1357, %v1359
        %v1361 = vsel %vm741, %v1355, %v1357
        %v1362 = vsel %vm741, %v1353, %v1355
        %v1363 = vsel %vm741, %v1359, %v1353
        %v1364 = vmul.f32 %v1363, %v749
        %v1365 = vmul.f32 %v1362, %v753
        %v1366 = vmul.f32 %v1361, %v757
        %v1367 = vmul.f32 %v1360, %v761
        %1368 = vrot.lane.b32.xlu0 %v1316, 1
        %v1369 = vpop.permute.xlu0 %1368
        %1370 = vrot.lane.b32.xlu0 %v1317, 1
        %v1371 = vpop.permute.xlu0 %1370
        %1372 = vrot.lane.b32.xlu0 %v1318, 1
        %v1373 = vpop.permute.xlu0 %1372
        %1374 = vrot.lane.b32.xlu0 %v1319, 1
        %v1375 = vpop.permute.xlu0 %1374
        %v1376 = vsel %vm774, %v1373, %v1375
        %v1377 = vsel %vm774, %v1371, %v1373
        %v1378 = vsel %vm774, %v1369, %v1371
        %v1379 = vsel %vm774, %v1375, %v1369
        %v1380 = vmul.f32 %v1379, %v782
        %v1381 = vmul.f32 %v1378, %v786
        %v1382 = vmul.f32 %v1377, %v790
        %v1383 = vmul.f32 %v1376, %v794
        %1384 = vrot.lane.b32.xlu0 %v1316, 127
        %v1385 = vpop.permute.xlu0 %1384
        %1386 = vrot.lane.b32.xlu0 %v1317, 127
        %v1387 = vpop.permute.xlu0 %1386
        %1388 = vrot.lane.b32.xlu0 %v1318, 127
        %v1389 = vpop.permute.xlu0 %1388
        %1390 = vrot.lane.b32.xlu0 %v1319, 127
        %v1391 = vpop.permute.xlu0 %1390
        %v1392 = vsel %vm807, %v1389, %v1391
        %v1393 = vsel %vm807, %v1387, %v1389
        %v1394 = vsel %vm807, %v1385, %v1387
        %v1395 = vsel %vm807, %v1391, %v1385
        %v1396 = vmul.f32 %v1394, %v815
        %v1397 = vmul.f32 %v1393, %v819
        %v1398 = vmul.f32 %v1392, %v823
        %v1399 = vmul.f32 %v1395, %v827
        %1400 = vrot.lane.b32.xlu0 %v1316, 113
        %v1401 = vpop.permute.xlu0 %1400
        %1402 = vrot.lane.b32.xlu0 %v1317, 113
        %v1403 = vpop.permute.xlu0 %1402
        %1404 = vrot.lane.b32.xlu0 %v1318, 113
        %v1405 = vpop.permute.xlu0 %1404
        %1406 = vrot.lane.b32.xlu0 %v1319, 113
        %v1407 = vpop.permute.xlu0 %1406
        %v1408 = vsel %vm840, %v1405, %v1407
        %v1409 = vsel %vm840, %v1403, %v1405
        %v1410 = vsel %vm840, %v1401, %v1403
        %v1411 = vsel %vm840, %v1407, %v1401
        %v1412 = vmul.f32 %v1410, %v848
        %v1413 = vmul.f32 %v1409, %v852
        %v1414 = vmul.f32 %v1408, %v856
        %v1415 = vmul.f32 %v1411, %v860
        %1416 = vrot.lane.b32.xlu0 %v1316, 112
        %v1417 = vpop.permute.xlu0 %1416
        %1418 = vrot.lane.b32.xlu0 %v1317, 112
        %v1419 = vpop.permute.xlu0 %1418
        %1420 = vrot.lane.b32.xlu0 %v1318, 112
        %v1421 = vpop.permute.xlu0 %1420
        %1422 = vrot.lane.b32.xlu0 %v1319, 112
        %v1423 = vpop.permute.xlu0 %1422
        %v1424 = vsel %vm873, %v1421, %v1423
        %v1425 = vsel %vm873, %v1419, %v1421
        %v1426 = vsel %vm873, %v1417, %v1419
        %v1427 = vsel %vm873, %v1423, %v1417
        %v1428 = vmul.f32 %v1426, %v881
        %v1429 = vmul.f32 %v1425, %v885
        %v1430 = vmul.f32 %v1424, %v889
        %v1431 = vmul.f32 %v1427, %v893
        %1432 = vrot.lane.b32.xlu0 %v1316, 111
        %v1433 = vpop.permute.xlu0 %1432
        %1434 = vrot.lane.b32.xlu0 %v1317, 111
        %v1435 = vpop.permute.xlu0 %1434
        %1436 = vrot.lane.b32.xlu0 %v1318, 111
        %v1437 = vpop.permute.xlu0 %1436
        %1438 = vrot.lane.b32.xlu0 %v1319, 111
        %v1439 = vpop.permute.xlu0 %1438
        %v1440 = vsel %vm906, %v1437, %v1439
        %v1441 = vsel %vm906, %v1435, %v1437
        %v1442 = vsel %vm906, %v1433, %v1435
        %v1443 = vsel %vm906, %v1439, %v1433
        %v1444 = vmul.f32 %v1442, %v914
        %v1445 = vmul.f32 %v1441, %v918
        %v1446 = vmul.f32 %v1440, %v922
        %v1447 = vmul.f32 %v1443, %v926
        %v1448 = vld [vmem:[%s8] sm:$0xf]
        %v1449 = vpack.c.bf16 %v1348, %v1332
        %v1450 = vpack.c.bf16 %v1349, %v1333
        %v1451 = vpack.c.bf16 %v1350, %v1334
        %v1452 = vpack.c.bf16 %v1351, %v1335
        %v1453 = vpack.c.bf16 %v1380, %v1364
        %v1454 = vpack.c.bf16 %v1381, %v1365
        %v1455 = vpack.c.bf16 %v1382, %v1366
        %v1456 = vpack.c.bf16 %v1383, %v1367
        %v1457 = vpack.c.bf16 %v1396, %v1316
        %v1458 = vpack.c.bf16 %v1397, %v1317
        %v1459 = vpack.c.bf16 %v1398, %v1318
        %v1460 = vpack.c.bf16 %v1399, %v1319
        %v1461 = vpack.c.bf16 %v1428, %v1412
        %v1462 = vpack.c.bf16 %v1429, %v1413
        %v1463 = vpack.c.bf16 %v1430, %v1414
        %v1464 = vpack.c.bf16 %v1431, %v1415
        %v1465 = vpack.c.bf16 %v1444, %v1444
        %v1466 = vpack.c.bf16 %v1445, %v1445
        %v1467 = vpack.c.bf16 %v1446, %v1446
        %v1468 = vpack.c.bf16 %v1447, %v1447
        %v1469 = vld [vmem:[%s9] sm:$0xff]
        %1471 = vset.pattern.permute.xlu0 0
        %1472 = vperm.xlu0 %1471, %v1469
        %v1473 = vpop.permute.xlu0 %1472
        %v1476 = vsel %vm958, %v1448, 0
        %v1479 = vsel %vm566, %v1465, 0
        %v1482 = vsel %vm566, %v1466, 0
        %v1485 = vsel %vm566, %v1467, 0
        %v1488 = vsel %vm566, %v1468, 0
        %1490 = vmatprep.subr.bf16.mxu0 %v1450
        %1491 = vmatpush1.bf16.msra.mxu0 %v1449
        %1492 = vmatprep.subr.bf16.mxu0 %v1454
        %1493 = vmatpush1.bf16.msra.mxu0 %v1453
        %1494 = vmatprep.subr.bf16.mxu0 %v1458
        %1495 = vmatpush1.bf16.msra.mxu0 %v1457
        %1496 = vmatprep.subr.bf16.mxu0 %v1462
        %1497 = vmatpush1.bf16.msra.mxu0 %v1461
        %1498 = vmatprep.subr.bf16.mxu0 %v1482
        %1499 = vmatpush1.bf16.msra.mxu0 %v1479
        %1500 = vmatprep.subr.bf16.mxu0 0
        %1501 = vmatpush1.bf16.msra.mxu0 0
        %1502 = vmatprep.subr.bf16.mxu0 0
        %1503 = vmatpush1.bf16.msra.mxu0 0
        %1504 = vmatprep.subr.bf16.mxu0 0
        %1505 = vmatpush1.bf16.msra.mxu0 0
        %1506 = vmatprep.subr.bf16.mxu0 0
        %1507 = vmatpush1.bf16.msra.mxu0 0
        %1508 = vmatprep.subr.bf16.mxu0 0
        %1509 = vmatpush1.bf16.msra.mxu0 0
        %1510 = vmatprep.subr.bf16.mxu0 0
        %1511 = vmatpush1.bf16.msra.mxu0 0
        %1512 = vmatprep.subr.bf16.mxu0 0
        %1513 = vmatpush1.bf16.msra.mxu0 0
        %1514 = vmatprep.subr.bf16.mxu0 0
        %1515 = vmatpush1.bf16.msra.mxu0 0
        %1516 = vmatprep.subr.bf16.mxu0 0
        %1517 = vmatpush1.bf16.msra.mxu0 0
        %1518 = vmatprep.subr.bf16.mxu0 0
        %1519 = vmatpush1.bf16.msra.mxu0 0
        %1520 = vmatprep.subr.bf16.mxu0 0
        %1521 = vmatpush1.bf16.msra.mxu0 0
        %1522 = vmatprep.mubr.bf16.mxu0 0
        %1523 = vmatmul.mubr.bf16.gmra.mrb[0].mxu0 %v1476
        %v1524 = vpop.f32.mrb[0].mxu0
        %v1525 = vadd.f32 %v1473, %v1524
        %v1526 = vpop.f32.mrb[0].mxu0
        %v1527 = vadd.f32 %v1473, %v1526
        %v1528 = vpop.f32.mrb[0].mxu0
        %v1529 = vpop.f32.mrb[0].mxu0
        %1530 = vdwg.mxu0
        %1531 = vmatprep.subr.bf16.mxu0 %v1452
        %1532 = vmatpush1.bf16.msra.mxu0 %v1451
        %1533 = vmatprep.subr.bf16.mxu0 %v1456
        %1534 = vmatpush1.bf16.msra.mxu0 %v1455
        %1535 = vmatprep.subr.bf16.mxu0 %v1460
        %1536 = vmatpush1.bf16.msra.mxu0 %v1459
        %1537 = vmatprep.subr.bf16.mxu0 %v1464
        %1538 = vmatpush1.bf16.msra.mxu0 %v1463
        %1539 = vmatprep.subr.bf16.mxu0 %v1488
        %1540 = vmatpush1.bf16.msra.mxu0 %v1485
        %1541 = vmatprep.subr.bf16.mxu0 0
        %1542 = vmatpush1.bf16.msra.mxu0 0
        %1543 = vmatprep.subr.bf16.mxu0 0
        %1544 = vmatpush1.bf16.msra.mxu0 0
        %1545 = vmatprep.subr.bf16.mxu0 0
        %1546 = vmatpush1.bf16.msra.mxu0 0
        %1547 = vmatprep.subr.bf16.mxu0 0
        %1548 = vmatpush1.bf16.msra.mxu0 0
        %1549 = vmatprep.subr.bf16.mxu0 0
        %1550 = vmatpush1.bf16.msra.mxu0 0
        %1551 = vmatprep.subr.bf16.mxu0 0
        %1552 = vmatpush1.bf16.msra.mxu0 0
        %1553 = vmatprep.subr.bf16.mxu0 0
        %1554 = vmatpush1.bf16.msra.mxu0 0
        %1555 = vmatprep.subr.bf16.mxu0 0
        %1556 = vmatpush1.bf16.msra.mxu0 0
        %1557 = vmatprep.subr.bf16.mxu0 0
        %1558 = vmatpush1.bf16.msra.mxu0 0
        %1559 = vmatprep.subr.bf16.mxu0 0
        %1560 = vmatpush1.bf16.msra.mxu0 0
        %1561 = vmatprep.subr.bf16.mxu0 0
        %1562 = vmatpush1.bf16.msra.mxu0 0
        %1563 = vmatprep.mubr.bf16.mxu0 0
        %1564 = vmatmul.mubr.bf16.gmra.mrb[0].mxu0 %v1476
        %v1565 = vpop.f32.mrb[0].mxu0
        %v1566 = vadd.f32 %v1473, %v1565
        %v1567 = vpop.f32.mrb[0].mxu0
        %v1568 = vadd.f32 %v1473, %v1567
        %v1569 = vpop.f32.mrb[0].mxu0
        %v1570 = vpop.f32.mrb[0].mxu0
        %1571 = vdwg.mxu0
        %v1572 = vmax.f32 %v1525, 0.0
        %v1573 = vmax.f32 %v1527, 0.0
        %v1574 = vmax.f32 %v1566, 0.0
        %v1575 = vmax.f32 %v1568, 0.0
        %v1576 = vadd.f32 %v1316, %v1572
        %v1577 = vadd.f32 %v1317, %v1573
        %v1578 = vadd.f32 %v1318, %v1574
        %v1579 = vadd.f32 %v1319, %v1575
        %v1580 = vadd.f32 %v1576, %v1578
        %v1581 = vadd.f32 %v1577, %v1579
        %v1582 = vsub.f32 %v1576, %v1578
        %v1583 = vsub.f32 %v1577, %v1579
        %v1584 = vand.u32 2147483647, %v1582
        %v1585 = vand.u32 2147483647, %v1583
        %v1586 = vld [vmem:[%s10] sm:$0xf]
        %v1587 = vpack.c.bf16 %v1580, %v1580
        %v1588 = vpack.c.bf16 %v1581, %v1581
        %v1589 = vld [vmem:[%s11] sm:$0xff]
        %1591 = vset.pattern.permute.xlu0 0
        %1592 = vperm.xlu0 %1591, %v1589
        %v1593 = vpop.permute.xlu0 %1592
        %v1596 = vsel %vm562, %v1586, 0
        %v1599 = vsel %vm566, %v1587, 0
        %v1602 = vsel %vm566, %v1588, 0
        %1604 = vmatprep.subr.bf16.mxu0 %v1602
        %1605 = vmatpush1.bf16.msra.mxu0 %v1599
        %1606 = vmatprep.subr.bf16.mxu0 0
        %1607 = vmatpush1.bf16.msra.mxu0 0
        %1608 = vmatprep.subr.bf16.mxu0 0
        %1609 = vmatpush1.bf16.msra.mxu0 0
        %1610 = vmatprep.subr.bf16.mxu0 0
        %1611 = vmatpush1.bf16.msra.mxu0 0
        %1612 = vmatprep.subr.bf16.mxu0 0
        %1613 = vmatpush1.bf16.msra.mxu0 0
        %1614 = vmatprep.subr.bf16.mxu0 0
        %1615 = vmatpush1.bf16.msra.mxu0 0
        %1616 = vmatprep.subr.bf16.mxu0 0
        %1617 = vmatpush1.bf16.msra.mxu0 0
        %1618 = vmatprep.subr.bf16.mxu0 0
        %1619 = vmatpush1.bf16.msra.mxu0 0
        %1620 = vmatprep.subr.bf16.mxu0 0
        %1621 = vmatpush1.bf16.msra.mxu0 0
        %1622 = vmatprep.subr.bf16.mxu0 0
        %1623 = vmatpush1.bf16.msra.mxu0 0
        %1624 = vmatprep.subr.bf16.mxu0 0
        %1625 = vmatpush1.bf16.msra.mxu0 0
        %1626 = vmatprep.subr.bf16.mxu0 0
        %1627 = vmatpush1.bf16.msra.mxu0 0
        %1628 = vmatprep.subr.bf16.mxu0 0
        %1629 = vmatpush1.bf16.msra.mxu0 0
        %1630 = vmatprep.subr.bf16.mxu0 0
        %1631 = vmatpush1.bf16.msra.mxu0 0
        %1632 = vmatprep.subr.bf16.mxu0 0
        %1633 = vmatpush1.bf16.msra.mxu0 0
        %1634 = vmatprep.subr.bf16.mxu0 0
        %1635 = vmatpush1.bf16.msra.mxu0 0
        %1636 = vmatprep.mubr.bf16.mxu0 0
        %1637 = vmatmul.mubr.bf16.gmra.mrb[0].mxu0 %v1596
        %v1638 = vpop.f32.mrb[0].mxu0
        %v1639 = vadd.f32 %v1593, %v1638
        %v1640 = vpop.f32.mrb[0].mxu0
        %v1641 = vadd.f32 %v1593, %v1640
        %v1642 = vpop.f32.mrb[0].mxu0
        %v1643 = vpop.f32.mrb[0].mxu0
        %1644 = vdwg.mxu0
        %v1645 = vmax.f32 %v1639, 0.0
        %v1646 = vmax.f32 %v1641, 0.0
        %v1647 = vld [vmem:[%s12] sm:$0xf]
        %v1648 = vpack.c.bf16 %v1584, %v1584
        %v1649 = vpack.c.bf16 %v1585, %v1585
        %v1650 = vld [vmem:[%s13] sm:$0xff]
        %1652 = vset.pattern.permute.xlu0 0
        %1653 = vperm.xlu0 %1652, %v1650
        %v1654 = vpop.permute.xlu0 %1653
        %v1657 = vsel %vm562, %v1647, 0
        %v1660 = vsel %vm566, %v1648, 0
        %v1663 = vsel %vm566, %v1649, 0
        %1665 = vmatprep.subr.bf16.mxu0 %v1663
        %1666 = vmatpush1.bf16.msra.mxu0 %v1660
        %1667 = vmatprep.subr.bf16.mxu0 0
        %1668 = vmatpush1.bf16.msra.mxu0 0
        %1669 = vmatprep.subr.bf16.mxu0 0
        %1670 = vmatpush1.bf16.msra.mxu0 0
        %1671 = vmatprep.subr.bf16.mxu0 0
        %1672 = vmatpush1.bf16.msra.mxu0 0
        %1673 = vmatprep.subr.bf16.mxu0 0
        %1674 = vmatpush1.bf16.msra.mxu0 0
        %1675 = vmatprep.subr.bf16.mxu0 0
        %1676 = vmatpush1.bf16.msra.mxu0 0
        %1677 = vmatprep.subr.bf16.mxu0 0
        %1678 = vmatpush1.bf16.msra.mxu0 0
        %1679 = vmatprep.subr.bf16.mxu0 0
        %1680 = vmatpush1.bf16.msra.mxu0 0
        %1681 = vmatprep.subr.bf16.mxu0 0
        %1682 = vmatpush1.bf16.msra.mxu0 0
        %1683 = vmatprep.subr.bf16.mxu0 0
        %1684 = vmatpush1.bf16.msra.mxu0 0
        %1685 = vmatprep.subr.bf16.mxu0 0
        %1686 = vmatpush1.bf16.msra.mxu0 0
        %1687 = vmatprep.subr.bf16.mxu0 0
        %1688 = vmatpush1.bf16.msra.mxu0 0
        %1689 = vmatprep.subr.bf16.mxu0 0
        %1690 = vmatpush1.bf16.msra.mxu0 0
        %1691 = vmatprep.subr.bf16.mxu0 0
        %1692 = vmatpush1.bf16.msra.mxu0 0
        %1693 = vmatprep.subr.bf16.mxu0 0
        %1694 = vmatpush1.bf16.msra.mxu0 0
        %1695 = vmatprep.subr.bf16.mxu0 0
        %1696 = vmatpush1.bf16.msra.mxu0 0
        %1697 = vmatprep.mubr.bf16.mxu0 0
        %1698 = vmatmul.mubr.bf16.gmra.mrb[0].mxu0 %v1657
        %v1699 = vpop.f32.mrb[0].mxu0
        %v1700 = vadd.f32 %v1654, %v1699
        %v1701 = vpop.f32.mrb[0].mxu0
        %v1702 = vadd.f32 %v1654, %v1701
        %v1703 = vpop.f32.mrb[0].mxu0
        %v1704 = vpop.f32.mrb[0].mxu0
        %1705 = vdwg.mxu0
        %v1706 = vmax.f32 %v1700, 0.0
        %v1707 = vmax.f32 %v1702, 0.0
        %1708 = vrot.lane.b32.xlu0 %v1706, 17
        %v1709 = vpop.permute.xlu0 %1708
        %1710 = vrot.lane.b32.xlu0 %v1707, 17
        %v1711 = vpop.permute.xlu0 %1710
        %v1712 = vsel %vm675, %v1709, %v1711
        %v1713 = vsel %vm675, %v1711, %v1709
        %v1714 = vmul.f32 %v1713, %v683
        %v1715 = vmul.f32 %v1712, %v687
        %1716 = vrot.lane.b32.xlu0 %v1706, 16
        %v1717 = vpop.permute.xlu0 %1716
        %1718 = vrot.lane.b32.xlu0 %v1707, 16
        %v1719 = vpop.permute.xlu0 %1718
        %v1720 = vsel %vm708, %v1717, %v1719
        %v1721 = vsel %vm708, %v1719, %v1717
        %v1722 = vmul.f32 %v1721, %v716
        %v1723 = vmul.f32 %v1720, %v720
        %1724 = vrot.lane.b32.xlu0 %v1706, 15
        %v1725 = vpop.permute.xlu0 %1724
        %1726 = vrot.lane.b32.xlu0 %v1707, 15
        %v1727 = vpop.permute.xlu0 %1726
        %v1728 = vsel %vm741, %v1725, %v1727
        %v1729 = vsel %vm741, %v1727, %v1725
        %v1730 = vmul.f32 %v1729, %v749
        %v1731 = vmul.f32 %v1728, %v753
        %1732 = vrot.lane.b32.xlu0 %v1706, 1
        %v1733 = vpop.permute.xlu0 %1732
        %1734 = vrot.lane.b32.xlu0 %v1707, 1
        %v1735 = vpop.permute.xlu0 %1734
        %v1736 = vsel %vm774, %v1733, %v1735
        %v1737 = vsel %vm774, %v1735, %v1733
        %v1738 = vmul.f32 %v1737, %v782
        %v1739 = vmul.f32 %v1736, %v786
        %1740 = vrot.lane.b32.xlu0 %v1706, 127
        %v1741 = vpop.permute.xlu0 %1740
        %1742 = vrot.lane.b32.xlu0 %v1707, 127
        %v1743 = vpop.permute.xlu0 %1742
        %v1744 = vsel %vm807, %v1741, %v1743
        %v1745 = vsel %vm807, %v1743, %v1741
        %v1746 = vmul.f32 %v1744, %v815
        %v1747 = vmul.f32 %v1745, %v819
        %1748 = vrot.lane.b32.xlu0 %v1706, 113
        %v1749 = vpop.permute.xlu0 %1748
        %1750 = vrot.lane.b32.xlu0 %v1707, 113
        %v1751 = vpop.permute.xlu0 %1750
        %v1752 = vsel %vm840, %v1749, %v1751
        %v1753 = vsel %vm840, %v1751, %v1749
        %v1754 = vmul.f32 %v1752, %v848
        %v1755 = vmul.f32 %v1753, %v852
        %1756 = vrot.lane.b32.xlu0 %v1706, 112
        %v1757 = vpop.permute.xlu0 %1756
        %1758 = vrot.lane.b32.xlu0 %v1707, 112
        %v1759 = vpop.permute.xlu0 %1758
        %v1760 = vsel %vm873, %v1757, %v1759
        %v1761 = vsel %vm873, %v1759, %v1757
        %v1762 = vmul.f32 %v1760, %v881
        %v1763 = vmul.f32 %v1761, %v885
        %1764 = vrot.lane.b32.xlu0 %v1706, 111
        %v1765 = vpop.permute.xlu0 %1764
        %1766 = vrot.lane.b32.xlu0 %v1707, 111
        %v1767 = vpop.permute.xlu0 %1766
        %v1768 = vsel %vm906, %v1765, %v1767
        %v1769 = vsel %vm906, %v1767, %v1765
        %v1770 = vmul.f32 %v1768, %v914
        %v1771 = vmul.f32 %v1769, %v918
        %v1772 = vld [vmem:[%s14] sm:$0xf]
        %v1773 = vpack.c.bf16 %v1722, %v1714
        %v1774 = vpack.c.bf16 %v1723, %v1715
        %v1775 = vpack.c.bf16 %v1738, %v1730
        %v1776 = vpack.c.bf16 %v1739, %v1731
        %v1777 = vpack.c.bf16 %v1746, %v1706
        %v1778 = vpack.c.bf16 %v1747, %v1707
        %v1779 = vpack.c.bf16 %v1762, %v1754
        %v1780 = vpack.c.bf16 %v1763, %v1755
        %v1781 = vpack.c.bf16 %v1770, %v1770
        %v1782 = vpack.c.bf16 %v1771, %v1771
        %v1783 = vld [vmem:[%s15] sm:$0xff]
        %1785 = vset.pattern.permute.xlu0 0
        %1786 = vperm.xlu0 %1785, %v1783
        %v1787 = vpop.permute.xlu0 %1786
        %v1790 = vsel %vm958, %v1772, 0
        %v1793 = vsel %vm566, %v1781, 0
        %v1796 = vsel %vm566, %v1782, 0
        %1798 = vmatprep.subr.bf16.mxu0 %v1774
        %1799 = vmatpush1.bf16.msra.mxu0 %v1773
        %1800 = vmatprep.subr.bf16.mxu0 %v1776
        %1801 = vmatpush1.bf16.msra.mxu0 %v1775
        %1802 = vmatprep.subr.bf16.mxu0 %v1778
        %1803 = vmatpush1.bf16.msra.mxu0 %v1777
        %1804 = vmatprep.subr.bf16.mxu0 %v1780
        %1805 = vmatpush1.bf16.msra.mxu0 %v1779
        %1806 = vmatprep.subr.bf16.mxu0 %v1796
        %1807 = vmatpush1.bf16.msra.mxu0 %v1793
        %1808 = vmatprep.subr.bf16.mxu0 0
        %1809 = vmatpush1.bf16.msra.mxu0 0
        %1810 = vmatprep.subr.bf16.mxu0 0
        %1811 = vmatpush1.bf16.msra.mxu0 0
        %1812 = vmatprep.subr.bf16.mxu0 0
        %1813 = vmatpush1.bf16.msra.mxu0 0
        %1814 = vmatprep.subr.bf16.mxu0 0
        %1815 = vmatpush1.bf16.msra.mxu0 0
        %1816 = vmatprep.subr.bf16.mxu0 0
        %1817 = vmatpush1.bf16.msra.mxu0 0
        %1818 = vmatprep.subr.bf16.mxu0 0
        %1819 = vmatpush1.bf16.msra.mxu0 0
        %1820 = vmatprep.subr.bf16.mxu0 0
        %1821 = vmatpush1.bf16.msra.mxu0 0
        %1822 = vmatprep.subr.bf16.mxu0 0
        %1823 = vmatpush1.bf16.msra.mxu0 0
        %1824 = vmatprep.subr.bf16.mxu0 0
        %1825 = vmatpush1.bf16.msra.mxu0 0
        %1826 = vmatprep.subr.bf16.mxu0 0
        %1827 = vmatpush1.bf16.msra.mxu0 0
        %1828 = vmatprep.subr.bf16.mxu0 0
        %1829 = vmatpush1.bf16.msra.mxu0 0
        %1830 = vmatprep.mubr.bf16.mxu0 0
        %1831 = vmatmul.mubr.bf16.gmra.mrb[0].mxu0 %v1790
        %v1832 = vpop.f32.mrb[0].mxu0
        %v1833 = vadd.f32 %v1787, %v1832
        %v1834 = vpop.f32.mrb[0].mxu0
        %v1835 = vadd.f32 %v1787, %v1834
        %v1836 = vpop.f32.mrb[0].mxu0
        %v1837 = vpop.f32.mrb[0].mxu0
        %1838 = vdwg.mxu0
        %v1839 = vmax.f32 %v1833, 0.0
        %v1840 = vmax.f32 %v1835, 0.0
        %v1841 = vadd.f32 %v1839, %v1645
        %v1842 = vadd.f32 %v1840, %v1646
        %1843 = vst [vmem:[%s537] sm:$0xff] %v1841
        %1844 = vst [vmem:[%s537 + $0x8] sm:$0xff] %v1842
        %s1845 = sand.u32 %s382, 1
        %s1846 = scalar_lea.sflag [#allocation4], %s1845
        %s1847 = sand.u32 %s382, 1
        %s1848 = smul.addr %s1847, 16
        %s1849 = scalar_lea.vmem [#allocation5], %s1848
        // Predicated region
        $region89: #{tpu_custom_call.1} parent=83 // pred_check
          %p1850 = pneg %p392
        $region90: #{tpu_custom_call.1} parent=83 // pred_check_branch
          %1852 = sbr.rel (%p1850) target = $region92
        $region91: #{tpu_custom_call.1} parent=83 // pred_region
          %s1854 = ssub.s32 256, 256
          %1855 = vsyncadd %s1846, %s1854
          %s1856 = smul.addr %s33, 2
          %s1857 = smul.addr %s1856, 128
          %s1858 = scalar_lea.hbm %s16, %s1857
          %s1860 = sshll.u32 %s1849, 4
          %s1861 = int_to_ptr.vmem [resolvable:$true] %s1860
          %1863 = dma.vmem_to_hbm [thread:$0]  %s1861, 256, %s1858, %s1846
        $region92: #{tpu_custom_call.1} parent=83 // pred_fallthru
          _
      $region84: #{tpu_custom_call.1} parent=5 // pred_fallthru
        _
      %p1864 = scmp.le.s32.totalorder 2, %s28
      // Predicated region
      $region93: #{tpu_custom_call.1} parent=5 // pred_check
        %p1865 = pneg %p1864
      $region94: #{tpu_custom_call.1} parent=5 // pred_check_branch
        %1867 = sbr.rel (%p1865) target = $region96
      $region95: #{tpu_custom_call.1} parent=5 // pred_region
        %s1868 = ssub.s32 %s28, 2
        // Predicated region
        $region97: #{tpu_custom_call.1} parent=95 // pred_check
          %p1869 = pneg %p398
        $region98: #{tpu_custom_call.1} parent=95 // pred_check_branch
          %1871 = sbr.rel (%p1869) target = $region100
        $region99: #{tpu_custom_call.1} parent=95 // pred_region
          %s1872 = sand.u32 %s383, 1
          %s1873 = scalar_lea.sflag [#allocation4], %s1872
          %s1874 = sand.u32 %s383, 1
          %s1875 = smul.addr %s1874, 16
          %s1876 = scalar_lea.vmem [#allocation5], %s1875
          %1877 = dma.done %s1873, 256
        $region100: #{tpu_custom_call.1} parent=95 // pred_fallthru
          _
      $region96: #{tpu_custom_call.1} parent=5 // pred_fallthru
        _
    $region6: #{tpu_custom_call.1} parent=1 // loop_footer
      %s32 = sadd.s32 1, %s28
    $region7: #{tpu_custom_call.1} parent=1 // loop_footer_branch
      %27 = sbr.rel target = $region3
    $region8: #{tpu_custom_call.1} parent=1 // loop_exit
      _
    %1878 = vsyncpa [#allocation3], 1
    %s1879 = scalar_lea.sflag [#allocation3], 1
    %1880 = vsyncpa %s1879, 1
    %1881 = vsyncpa [#allocation4], 1
    %s1882 = scalar_lea.sflag [#allocation4], 1
    %1883 = vsyncpa %s1882, 1

</llo_original>
